<compile_context>
chip_gen: v7x
topology: tpu7x:2x2x1
jax: 0.10.0
libtpu: 0.0.40
codegen_flags: <defaults>
</compile_context>

<pallas_src>
import functools

import jax
import jax.numpy as jnp
from jax.experimental import pallas as pl
from jax.experimental.pallas import tpu as pltpu


def _attention_kernel(x_ref, wq_ref, wk_ref, wv_ref, wproj_ref, bproj_ref,
                      o_ref, qh_s, kh_s, vh_s, y_s,
                      *, num_heads, head_dim):
    """One grid step handles one batch element.

    x_ref            : (1, N, C)   bf16 input tokens
    wq/wk/wv_ref     : (C, C)      bf16 projection weights (Wq pre-scaled)
    wproj_ref        : (C, C)      bf16 output projection weight
    bproj_ref        : (1, C)      f32  output projection bias
    o_ref            : (1, N, C)   output tokens (original input dtype)
    qh_s/kh_s/vh_s   : (H, N, hd)  bf16 head-major scratch
    y_s              : (N, C)      bf16 merged-heads scratch
    """
    x = x_ref[0]                                                     # (N, C) bf16

    # Q/K/V projections (MXU, f32 accumulation), each cast to bf16 as produced
    # so no (N, 3C) f32 slab is ever live.
    q = jnp.dot(x, wq_ref[...],
                preferred_element_type=jnp.float32).astype(jnp.bfloat16)
    k = jnp.dot(x, wk_ref[...],
                preferred_element_type=jnp.float32).astype(jnp.bfloat16)
    v = jnp.dot(x, wv_ref[...],
                preferred_element_type=jnp.float32).astype(jnp.bfloat16)

    # Token-major (N, C) -> head-major (H, N, hd), once per tensor, as explicit
    # slab copies.  (The column layout of the fused qkv weight is h*hd + d, so
    # head h occupies columns [h*hd, (h+1)*hd).)
    for h in range(num_heads):
        sl = slice(h * head_dim, (h + 1) * head_dim)
        qh_s[h] = q[:, sl]
        kh_s[h] = k[:, sl]
        vh_s[h] = v[:, sl]

    qh = qh_s[...]                                                   # (H, N, hd)
    kh = kh_s[...]
    vh = vh_s[...]

    # Batched attention scores over all heads (single MXU call, f32 out).
    s = jnp.einsum('hqd,hkd->hqk', qh, kh,
                   preferred_element_type=jnp.float32)               # (H, N, N)

    # Numerically-stable, *unnormalized* softmax; normalization is deferred
    # past the P@V matmul (H*N*hd multiplies instead of H*N*N).
    m = jnp.max(s, axis=-1, keepdims=True)                           # (H, N, 1)
    p = jnp.exp(s - m)                                               # f32
    l = jnp.sum(p, axis=-1, keepdims=True)                           # (H, N, 1)
    inv_l = pl.reciprocal(l, approx=True)                            # EUP slot

    o = jnp.einsum('hqk,hkd->hqd', p.astype(jnp.bfloat16), vh,
                   preferred_element_type=jnp.float32)               # (H, N, hd)
    o = (o * inv_l).astype(jnp.bfloat16)

    # Merge heads back to (N, C) for the (MXU-efficient) fused output
    # projection.  (At hd >= 128 these stores are unmasked full-lane slabs.)
    for h in range(num_heads):
        y_s[:, h * head_dim:(h + 1) * head_dim] = o[h]

    out = jnp.dot(y_s[...], wproj_ref[...],
                  preferred_element_type=jnp.float32) + bproj_ref[...]
    o_ref[0] = out.astype(o_ref.dtype)


def attention(x, wqkv, wproj, bproj, *, num_heads):
    """Pallas-backed forward pass of the Attention module.

    x     : (B, N, C)
    wqkv  : (C, 3C)  fused qkv weight in (in, out) layout (qkv_bias=False)
    wproj : (C, C)   output projection weight in (in, out) layout
    bproj : (C,)     output projection bias
    """
    B, N, C = x.shape
    head_dim = C // num_heads
    scale = head_dim ** (-0.5)
    out_dtype = x.dtype

    # Split the fused weight into Q/K/V, fold the softmax scale into Wq
    # ((x @ (Wq*s)) == (x @ Wq)*s), and cast MXU operands to bf16 once.
    # (Recomputed per call; cheap wrapper-side XLA ops.)
    wq = (wqkv[:, :C] * scale).astype(jnp.bfloat16)
    wk = wqkv[:, C:2 * C].astype(jnp.bfloat16)
    wv = wqkv[:, 2 * C:].astype(jnp.bfloat16)
    wproj_bf = wproj.astype(jnp.bfloat16)
    bproj_f32 = bproj.reshape(1, C).astype(jnp.float32)
    x_bf = x.astype(jnp.bfloat16)

    kernel = functools.partial(
        _attention_kernel, num_heads=num_heads, head_dim=head_dim)

    return pl.pallas_call(
        kernel,
        out_shape=jax.ShapeDtypeStruct((B, N, C), out_dtype),
        grid=(B,),
        in_specs=[
            pl.BlockSpec((1, N, C), lambda b: (b, 0, 0)),   # x: one batch / step
            pl.BlockSpec((C, C), lambda b: (0, 0)),         # Wq (constant -> DMA'd once)
            pl.BlockSpec((C, C), lambda b: (0, 0)),         # Wk
            pl.BlockSpec((C, C), lambda b: (0, 0)),         # Wv
            pl.BlockSpec((C, C), lambda b: (0, 0)),         # Wproj
            pl.BlockSpec((1, C), lambda b: (0, 0)),         # proj bias
        ],
        out_specs=pl.BlockSpec((1, N, C), lambda b: (b, 0, 0)),
        scratch_shapes=[
            pltpu.VMEM((num_heads, N, head_dim), jnp.bfloat16),   # q head-major
            pltpu.VMEM((num_heads, N, head_dim), jnp.bfloat16),   # k head-major
            pltpu.VMEM((num_heads, N, head_dim), jnp.bfloat16),   # v head-major
            pltpu.VMEM((N, C), jnp.bfloat16),                     # merged heads
        ],
        compiler_params=pltpu.CompilerParams(
            dimension_semantics=("parallel",),
            vmem_limit_bytes=64 * 1024 * 1024),
    )(x_bf, wq, wk, wv, wproj_bf, bproj_f32)


def attention_ref(x, wqkv, wproj, bproj, *, num_heads):
    """Pure-JAX f32 reference mirroring the PyTorch forward exactly."""
    B, N, C = x.shape
    hd = C // num_heads
    scale = hd ** (-0.5)
    qkv = (x @ wqkv).reshape(B, N, 3, num_heads, hd).transpose(2, 0, 3, 1, 4)
    q, k, v = qkv[0], qkv[1], qkv[2]                       # (B, H, N, hd)
    attn = (q * scale) @ jnp.swapaxes(k, -2, -1)           # (B, H, N, N)
    attn = jax.nn.softmax(attn, axis=-1)
    y = (attn @ v).transpose(0, 2, 1, 3).reshape(B, N, C)
    return y @ wproj + bproj


if __name__ == "__main__":
    # Small shapes consistent with the module: B=2 batches, N=8 tokens,
    # C=32 channels, 8 heads (head_dim=4).
    B, N, C, H = 2, 8, 32, 8

    key = jax.random.PRNGKey(0)
    kx, kq, kp, kb = jax.random.split(key, 4)

    x = jax.random.normal(kx, (B, N, C), dtype=jnp.float32)
    # Deterministic parameter init (qkv has no bias since qkv_bias=False).
    wqkv = jax.random.normal(kq, (C, 3 * C), dtype=jnp.float32) * (C ** -0.5)
    wproj = jax.random.normal(kp, (C, C), dtype=jnp.float32) * (C ** -0.5)
    bproj = jax.random.normal(kb, (C,), dtype=jnp.float32) * 0.02

    out = attention(x, wqkv, wproj, bproj, num_heads=H)
    out = jax.block_until_ready(out)

    ref = attention_ref(x, wqkv, wproj, bproj, num_heads=H)
    assert out.shape == (B, N, C)
    # bf16 MXU operands (f32 accumulation) + approx reciprocal -> compare
    # against the f32 reference with a bf16-appropriate tolerance.
    assert jnp.allclose(out, ref, atol=5e-2, rtol=5e-2), "mismatch vs reference"

    print("KERNEL_OK")
</pallas_src>

<mosaic_0001>
module attributes {stable_mosaic.version = 11 : i64} {
  func.func @_attention_kernel(%arg0: i32, %arg1: memref<1x8x32xbf16, #tpu.memory_space<vmem>>, %arg2: memref<32x32xbf16, #tpu.memory_space<vmem>>, %arg3: memref<32x32xbf16, #tpu.memory_space<vmem>>, %arg4: memref<32x32xbf16, #tpu.memory_space<vmem>>, %arg5: memref<32x32xbf16, #tpu.memory_space<vmem>>, %arg6: memref<1x32xf32, #tpu.memory_space<vmem>>, %arg7: memref<1x8x32xf32, #tpu.memory_space<vmem>>, %arg8: memref<8x8x4xbf16, #tpu.memory_space<vmem>>, %arg9: memref<8x8x4xbf16, #tpu.memory_space<vmem>>, %arg10: memref<8x8x4xbf16, #tpu.memory_space<vmem>>, %arg11: memref<8x32xbf16, #tpu.memory_space<vmem>>) attributes {dimension_semantics = [#tpu.dimension_semantics<parallel>], iteration_bounds = array<i64: 2>, scalar_prefetch = 0 : i64, scratch_operands = 4 : i64, tpu.core_type = #tpu.core_type<tc>, window_params = [{transform_indices = @transform_0, window_bounds = array<i64: 1, 8, 32>}, {pipeline_mode = #tpu.pipeline_mode<synchronous>, transform_indices = @transform_1, window_bounds = array<i64: 32, 32>}, {pipeline_mode = #tpu.pipeline_mode<synchronous>, transform_indices = @transform_2, window_bounds = array<i64: 32, 32>}, {pipeline_mode = #tpu.pipeline_mode<synchronous>, transform_indices = @transform_3, window_bounds = array<i64: 32, 32>}, {pipeline_mode = #tpu.pipeline_mode<synchronous>, transform_indices = @transform_4, window_bounds = array<i64: 32, 32>}, {pipeline_mode = #tpu.pipeline_mode<synchronous>, transform_indices = @transform_5, window_bounds = array<i64: 1, 32>}, {transform_indices = @transform_6, window_bounds = array<i64: 1, 8, 32>}]} {
    %c0 = arith.constant 0 : index
    %c0_0 = arith.constant 0 : index
    %c0_1 = arith.constant 0 : index
    %0 = vector.load %arg1[%c0, %c0_0, %c0_1] : memref<1x8x32xbf16, #tpu.memory_space<vmem>>, vector<1x8x32xbf16>
    %1 = vector.shape_cast %0 : vector<1x8x32xbf16> to vector<8x32xbf16>
    %c0_2 = arith.constant 0 : index
    %c0_3 = arith.constant 0 : index
    %2 = vector.load %arg2[%c0_2, %c0_3] : memref<32x32xbf16, #tpu.memory_space<vmem>>, vector<32x32xbf16>
    %cst = arith.constant dense<0.000000e+00> : vector<8x32xf32>
    %3 = tpu.matmul %1, %2, %cst {dimension_numbers = #tpu.dot_dimension_numbers<[1], [0], [0], [1], [0, 0, 1, 1], [], []>} : vector<8x32xbf16>, vector<32x32xbf16>, vector<8x32xf32> -> vector<8x32xf32>
    %4 = arith.truncf %3 : vector<8x32xf32> to vector<8x32xbf16>
    %c0_4 = arith.constant 0 : index
    %c0_5 = arith.constant 0 : index
    %5 = vector.load %arg3[%c0_4, %c0_5] : memref<32x32xbf16, #tpu.memory_space<vmem>>, vector<32x32xbf16>
    %cst_6 = arith.constant dense<0.000000e+00> : vector<8x32xf32>
    %6 = tpu.matmul %1, %5, %cst_6 {dimension_numbers = #tpu.dot_dimension_numbers<[1], [0], [0], [1], [0, 0, 1, 1], [], []>} : vector<8x32xbf16>, vector<32x32xbf16>, vector<8x32xf32> -> vector<8x32xf32>
    %7 = arith.truncf %6 : vector<8x32xf32> to vector<8x32xbf16>
    %c0_7 = arith.constant 0 : index
    %c0_8 = arith.constant 0 : index
    %8 = vector.load %arg4[%c0_7, %c0_8] : memref<32x32xbf16, #tpu.memory_space<vmem>>, vector<32x32xbf16>
    %cst_9 = arith.constant dense<0.000000e+00> : vector<8x32xf32>
    %9 = tpu.matmul %1, %8, %cst_9 {dimension_numbers = #tpu.dot_dimension_numbers<[1], [0], [0], [1], [0, 0, 1, 1], [], []>} : vector<8x32xbf16>, vector<32x32xbf16>, vector<8x32xf32> -> vector<8x32xf32>
    %10 = arith.truncf %9 : vector<8x32xf32> to vector<8x32xbf16>
    %11 = vector.extract_strided_slice %4 {offsets = [0, 0], sizes = [8, 4], strides = [1, 1]} : vector<8x32xbf16> to vector<8x4xbf16>
    %c0_10 = arith.constant 0 : index
    %c0_11 = arith.constant 0 : index
    %c0_12 = arith.constant 0 : index
    %12 = vector.load %arg8[%c0_10, %c0_11, %c0_12] : memref<8x8x4xbf16, #tpu.memory_space<vmem>>, vector<1x8x4xbf16>
    %13 = vector.shape_cast %12 : vector<1x8x4xbf16> to vector<8x4xbf16>
    %14 = vector.shape_cast %11 : vector<8x4xbf16> to vector<1x8x4xbf16>
    tpu.vector_store %arg8[%c0_10, %c0_11, %c0_12], %14 {strides = array<i32>} : memref<8x8x4xbf16, #tpu.memory_space<vmem>>, vector<1x8x4xbf16>,
    %15 = vector.extract_strided_slice %7 {offsets = [0, 0], sizes = [8, 4], strides = [1, 1]} : vector<8x32xbf16> to vector<8x4xbf16>
    %c0_13 = arith.constant 0 : index
    %c0_14 = arith.constant 0 : index
    %c0_15 = arith.constant 0 : index
    %16 = vector.load %arg9[%c0_13, %c0_14, %c0_15] : memref<8x8x4xbf16, #tpu.memory_space<vmem>>, vector<1x8x4xbf16>
    %17 = vector.shape_cast %16 : vector<1x8x4xbf16> to vector<8x4xbf16>
    %18 = vector.shape_cast %15 : vector<8x4xbf16> to vector<1x8x4xbf16>
    tpu.vector_store %arg9[%c0_13, %c0_14, %c0_15], %18 {strides = array<i32>} : memref<8x8x4xbf16, #tpu.memory_space<vmem>>, vector<1x8x4xbf16>,
    %19 = vector.extract_strided_slice %10 {offsets = [0, 0], sizes = [8, 4], strides = [1, 1]} : vector<8x32xbf16> to vector<8x4xbf16>
    %c0_16 = arith.constant 0 : index
    %c0_17 = arith.constant 0 : index
    %c0_18 = arith.constant 0 : index
    %20 = vector.load %arg10[%c0_16, %c0_17, %c0_18] : memref<8x8x4xbf16, #tpu.memory_space<vmem>>, vector<1x8x4xbf16>
    %21 = vector.shape_cast %20 : vector<1x8x4xbf16> to vector<8x4xbf16>
    %22 = vector.shape_cast %19 : vector<8x4xbf16> to vector<1x8x4xbf16>
    tpu.vector_store %arg10[%c0_16, %c0_17, %c0_18], %22 {strides = array<i32>} : memref<8x8x4xbf16, #tpu.memory_space<vmem>>, vector<1x8x4xbf16>,
    %23 = vector.extract_strided_slice %4 {offsets = [0, 4], sizes = [8, 4], strides = [1, 1]} : vector<8x32xbf16> to vector<8x4xbf16>
    %c1 = arith.constant 1 : index
    %c0_19 = arith.constant 0 : index
    %c0_20 = arith.constant 0 : index
    %24 = vector.load %arg8[%c1, %c0_19, %c0_20] : memref<8x8x4xbf16, #tpu.memory_space<vmem>>, vector<1x8x4xbf16>
    %25 = vector.shape_cast %24 : vector<1x8x4xbf16> to vector<8x4xbf16>
    %26 = vector.shape_cast %23 : vector<8x4xbf16> to vector<1x8x4xbf16>
    tpu.vector_store %arg8[%c1, %c0_19, %c0_20], %26 {strides = array<i32>} : memref<8x8x4xbf16, #tpu.memory_space<vmem>>, vector<1x8x4xbf16>,
    %27 = vector.extract_strided_slice %7 {offsets = [0, 4], sizes = [8, 4], strides = [1, 1]} : vector<8x32xbf16> to vector<8x4xbf16>
    %c1_21 = arith.constant 1 : index
    %c0_22 = arith.constant 0 : index
    %c0_23 = arith.constant 0 : index
    %28 = vector.load %arg9[%c1_21, %c0_22, %c0_23] : memref<8x8x4xbf16, #tpu.memory_space<vmem>>, vector<1x8x4xbf16>
    %29 = vector.shape_cast %28 : vector<1x8x4xbf16> to vector<8x4xbf16>
    %30 = vector.shape_cast %27 : vector<8x4xbf16> to vector<1x8x4xbf16>
    tpu.vector_store %arg9[%c1_21, %c0_22, %c0_23], %30 {strides = array<i32>} : memref<8x8x4xbf16, #tpu.memory_space<vmem>>, vector<1x8x4xbf16>,
    %31 = vector.extract_strided_slice %10 {offsets = [0, 4], sizes = [8, 4], strides = [1, 1]} : vector<8x32xbf16> to vector<8x4xbf16>
    %c1_24 = arith.constant 1 : index
    %c0_25 = arith.constant 0 : index
    %c0_26 = arith.constant 0 : index
    %32 = vector.load %arg10[%c1_24, %c0_25, %c0_26] : memref<8x8x4xbf16, #tpu.memory_space<vmem>>, vector<1x8x4xbf16>
    %33 = vector.shape_cast %32 : vector<1x8x4xbf16> to vector<8x4xbf16>
    %34 = vector.shape_cast %31 : vector<8x4xbf16> to vector<1x8x4xbf16>
    tpu.vector_store %arg10[%c1_24, %c0_25, %c0_26], %34 {strides = array<i32>} : memref<8x8x4xbf16, #tpu.memory_space<vmem>>, vector<1x8x4xbf16>,
    %35 = vector.extract_strided_slice %4 {offsets = [0, 8], sizes = [8, 4], strides = [1, 1]} : vector<8x32xbf16> to vector<8x4xbf16>
    %c2 = arith.constant 2 : index
    %c0_27 = arith.constant 0 : index
    %c0_28 = arith.constant 0 : index
    %36 = vector.load %arg8[%c2, %c0_27, %c0_28] : memref<8x8x4xbf16, #tpu.memory_space<vmem>>, vector<1x8x4xbf16>
    %37 = vector.shape_cast %36 : vector<1x8x4xbf16> to vector<8x4xbf16>
    %38 = vector.shape_cast %35 : vector<8x4xbf16> to vector<1x8x4xbf16>
    tpu.vector_store %arg8[%c2, %c0_27, %c0_28], %38 {strides = array<i32>} : memref<8x8x4xbf16, #tpu.memory_space<vmem>>, vector<1x8x4xbf16>,
    %39 = vector.extract_strided_slice %7 {offsets = [0, 8], sizes = [8, 4], strides = [1, 1]} : vector<8x32xbf16> to vector<8x4xbf16>
    %c2_29 = arith.constant 2 : index
    %c0_30 = arith.constant 0 : index
    %c0_31 = arith.constant 0 : index
    %40 = vector.load %arg9[%c2_29, %c0_30, %c0_31] : memref<8x8x4xbf16, #tpu.memory_space<vmem>>, vector<1x8x4xbf16>
    %41 = vector.shape_cast %40 : vector<1x8x4xbf16> to vector<8x4xbf16>
    %42 = vector.shape_cast %39 : vector<8x4xbf16> to vector<1x8x4xbf16>
    tpu.vector_store %arg9[%c2_29, %c0_30, %c0_31], %42 {strides = array<i32>} : memref<8x8x4xbf16, #tpu.memory_space<vmem>>, vector<1x8x4xbf16>,
    %43 = vector.extract_strided_slice %10 {offsets = [0, 8], sizes = [8, 4], strides = [1, 1]} : vector<8x32xbf16> to vector<8x4xbf16>
    %c2_32 = arith.constant 2 : index
    %c0_33 = arith.constant 0 : index
    %c0_34 = arith.constant 0 : index
    %44 = vector.load %arg10[%c2_32, %c0_33, %c0_34] : memref<8x8x4xbf16, #tpu.memory_space<vmem>>, vector<1x8x4xbf16>
    %45 = vector.shape_cast %44 : vector<1x8x4xbf16> to vector<8x4xbf16>
    %46 = vector.shape_cast %43 : vector<8x4xbf16> to vector<1x8x4xbf16>
    tpu.vector_store %arg10[%c2_32, %c0_33, %c0_34], %46 {strides = array<i32>} : memref<8x8x4xbf16, #tpu.memory_space<vmem>>, vector<1x8x4xbf16>,
    %47 = vector.extract_strided_slice %4 {offsets = [0, 12], sizes = [8, 4], strides = [1, 1]} : vector<8x32xbf16> to vector<8x4xbf16>
    %c3 = arith.constant 3 : index
    %c0_35 = arith.constant 0 : index
    %c0_36 = arith.constant 0 : index
    %48 = vector.load %arg8[%c3, %c0_35, %c0_36] : memref<8x8x4xbf16, #tpu.memory_space<vmem>>, vector<1x8x4xbf16>
    %49 = vector.shape_cast %48 : vector<1x8x4xbf16> to vector<8x4xbf16>
    %50 = vector.shape_cast %47 : vector<8x4xbf16> to vector<1x8x4xbf16>
    tpu.vector_store %arg8[%c3, %c0_35, %c0_36], %50 {strides = array<i32>} : memref<8x8x4xbf16, #tpu.memory_space<vmem>>, vector<1x8x4xbf16>,
    %51 = vector.extract_strided_slice %7 {offsets = [0, 12], sizes = [8, 4], strides = [1, 1]} : vector<8x32xbf16> to vector<8x4xbf16>
    %c3_37 = arith.constant 3 : index
    %c0_38 = arith.constant 0 : index
    %c0_39 = arith.constant 0 : index
    %52 = vector.load %arg9[%c3_37, %c0_38, %c0_39] : memref<8x8x4xbf16, #tpu.memory_space<vmem>>, vector<1x8x4xbf16>
    %53 = vector.shape_cast %52 : vector<1x8x4xbf16> to vector<8x4xbf16>
    %54 = vector.shape_cast %51 : vector<8x4xbf16> to vector<1x8x4xbf16>
    tpu.vector_store %arg9[%c3_37, %c0_38, %c0_39], %54 {strides = array<i32>} : memref<8x8x4xbf16, #tpu.memory_space<vmem>>, vector<1x8x4xbf16>,
    %55 = vector.extract_strided_slice %10 {offsets = [0, 12], sizes = [8, 4], strides = [1, 1]} : vector<8x32xbf16> to vector<8x4xbf16>
    %c3_40 = arith.constant 3 : index
    %c0_41 = arith.constant 0 : index
    %c0_42 = arith.constant 0 : index
    %56 = vector.load %arg10[%c3_40, %c0_41, %c0_42] : memref<8x8x4xbf16, #tpu.memory_space<vmem>>, vector<1x8x4xbf16>
    %57 = vector.shape_cast %56 : vector<1x8x4xbf16> to vector<8x4xbf16>
    %58 = vector.shape_cast %55 : vector<8x4xbf16> to vector<1x8x4xbf16>
    tpu.vector_store %arg10[%c3_40, %c0_41, %c0_42], %58 {strides = array<i32>} : memref<8x8x4xbf16, #tpu.memory_space<vmem>>, vector<1x8x4xbf16>,
    %59 = vector.extract_strided_slice %4 {offsets = [0, 16], sizes = [8, 4], strides = [1, 1]} : vector<8x32xbf16> to vector<8x4xbf16>
    %c4 = arith.constant 4 : index
    %c0_43 = arith.constant 0 : index
    %c0_44 = arith.constant 0 : index
    %60 = vector.load %arg8[%c4, %c0_43, %c0_44] : memref<8x8x4xbf16, #tpu.memory_space<vmem>>, vector<1x8x4xbf16>
    %61 = vector.shape_cast %60 : vector<1x8x4xbf16> to vector<8x4xbf16>
    %62 = vector.shape_cast %59 : vector<8x4xbf16> to vector<1x8x4xbf16>
    tpu.vector_store %arg8[%c4, %c0_43, %c0_44], %62 {strides = array<i32>} : memref<8x8x4xbf16, #tpu.memory_space<vmem>>, vector<1x8x4xbf16>,
    %63 = vector.extract_strided_slice %7 {offsets = [0, 16], sizes = [8, 4], strides = [1, 1]} : vector<8x32xbf16> to vector<8x4xbf16>
    %c4_45 = arith.constant 4 : index
    %c0_46 = arith.constant 0 : index
    %c0_47 = arith.constant 0 : index
    %64 = vector.load %arg9[%c4_45, %c0_46, %c0_47] : memref<8x8x4xbf16, #tpu.memory_space<vmem>>, vector<1x8x4xbf16>
    %65 = vector.shape_cast %64 : vector<1x8x4xbf16> to vector<8x4xbf16>
    %66 = vector.shape_cast %63 : vector<8x4xbf16> to vector<1x8x4xbf16>
    tpu.vector_store %arg9[%c4_45, %c0_46, %c0_47], %66 {strides = array<i32>} : memref<8x8x4xbf16, #tpu.memory_space<vmem>>, vector<1x8x4xbf16>,
    %67 = vector.extract_strided_slice %10 {offsets = [0, 16], sizes = [8, 4], strides = [1, 1]} : vector<8x32xbf16> to vector<8x4xbf16>
    %c4_48 = arith.constant 4 : index
    %c0_49 = arith.constant 0 : index
    %c0_50 = arith.constant 0 : index
    %68 = vector.load %arg10[%c4_48, %c0_49, %c0_50] : memref<8x8x4xbf16, #tpu.memory_space<vmem>>, vector<1x8x4xbf16>
    %69 = vector.shape_cast %68 : vector<1x8x4xbf16> to vector<8x4xbf16>
    %70 = vector.shape_cast %67 : vector<8x4xbf16> to vector<1x8x4xbf16>
    tpu.vector_store %arg10[%c4_48, %c0_49, %c0_50], %70 {strides = array<i32>} : memref<8x8x4xbf16, #tpu.memory_space<vmem>>, vector<1x8x4xbf16>,
    %71 = vector.extract_strided_slice %4 {offsets = [0, 20], sizes = [8, 4], strides = [1, 1]} : vector<8x32xbf16> to vector<8x4xbf16>
    %c5 = arith.constant 5 : index
    %c0_51 = arith.constant 0 : index
    %c0_52 = arith.constant 0 : index
    %72 = vector.load %arg8[%c5, %c0_51, %c0_52] : memref<8x8x4xbf16, #tpu.memory_space<vmem>>, vector<1x8x4xbf16>
    %73 = vector.shape_cast %72 : vector<1x8x4xbf16> to vector<8x4xbf16>
    %74 = vector.shape_cast %71 : vector<8x4xbf16> to vector<1x8x4xbf16>
    tpu.vector_store %arg8[%c5, %c0_51, %c0_52], %74 {strides = array<i32>} : memref<8x8x4xbf16, #tpu.memory_space<vmem>>, vector<1x8x4xbf16>,
    %75 = vector.extract_strided_slice %7 {offsets = [0, 20], sizes = [8, 4], strides = [1, 1]} : vector<8x32xbf16> to vector<8x4xbf16>
    %c5_53 = arith.constant 5 : index
    %c0_54 = arith.constant 0 : index
    %c0_55 = arith.constant 0 : index
    %76 = vector.load %arg9[%c5_53, %c0_54, %c0_55] : memref<8x8x4xbf16, #tpu.memory_space<vmem>>, vector<1x8x4xbf16>
    %77 = vector.shape_cast %76 : vector<1x8x4xbf16> to vector<8x4xbf16>
    %78 = vector.shape_cast %75 : vector<8x4xbf16> to vector<1x8x4xbf16>
    tpu.vector_store %arg9[%c5_53, %c0_54, %c0_55], %78 {strides = array<i32>} : memref<8x8x4xbf16, #tpu.memory_space<vmem>>, vector<1x8x4xbf16>,
    %79 = vector.extract_strided_slice %10 {offsets = [0, 20], sizes = [8, 4], strides = [1, 1]} : vector<8x32xbf16> to vector<8x4xbf16>
    %c5_56 = arith.constant 5 : index
    %c0_57 = arith.constant 0 : index
    %c0_58 = arith.constant 0 : index
    %80 = vector.load %arg10[%c5_56, %c0_57, %c0_58] : memref<8x8x4xbf16, #tpu.memory_space<vmem>>, vector<1x8x4xbf16>
    %81 = vector.shape_cast %80 : vector<1x8x4xbf16> to vector<8x4xbf16>
    %82 = vector.shape_cast %79 : vector<8x4xbf16> to vector<1x8x4xbf16>
    tpu.vector_store %arg10[%c5_56, %c0_57, %c0_58], %82 {strides = array<i32>} : memref<8x8x4xbf16, #tpu.memory_space<vmem>>, vector<1x8x4xbf16>,
    %83 = vector.extract_strided_slice %4 {offsets = [0, 24], sizes = [8, 4], strides = [1, 1]} : vector<8x32xbf16> to vector<8x4xbf16>
    %c6 = arith.constant 6 : index
    %c0_59 = arith.constant 0 : index
    %c0_60 = arith.constant 0 : index
    %84 = vector.load %arg8[%c6, %c0_59, %c0_60] : memref<8x8x4xbf16, #tpu.memory_space<vmem>>, vector<1x8x4xbf16>
    %85 = vector.shape_cast %84 : vector<1x8x4xbf16> to vector<8x4xbf16>
    %86 = vector.shape_cast %83 : vector<8x4xbf16> to vector<1x8x4xbf16>
    tpu.vector_store %arg8[%c6, %c0_59, %c0_60], %86 {strides = array<i32>} : memref<8x8x4xbf16, #tpu.memory_space<vmem>>, vector<1x8x4xbf16>,
    %87 = vector.extract_strided_slice %7 {offsets = [0, 24], sizes = [8, 4], strides = [1, 1]} : vector<8x32xbf16> to vector<8x4xbf16>
    %c6_61 = arith.constant 6 : index
    %c0_62 = arith.constant 0 : index
    %c0_63 = arith.constant 0 : index
    %88 = vector.load %arg9[%c6_61, %c0_62, %c0_63] : memref<8x8x4xbf16, #tpu.memory_space<vmem>>, vector<1x8x4xbf16>
    %89 = vector.shape_cast %88 : vector<1x8x4xbf16> to vector<8x4xbf16>
    %90 = vector.shape_cast %87 : vector<8x4xbf16> to vector<1x8x4xbf16>
    tpu.vector_store %arg9[%c6_61, %c0_62, %c0_63], %90 {strides = array<i32>} : memref<8x8x4xbf16, #tpu.memory_space<vmem>>, vector<1x8x4xbf16>,
    %91 = vector.extract_strided_slice %10 {offsets = [0, 24], sizes = [8, 4], strides = [1, 1]} : vector<8x32xbf16> to vector<8x4xbf16>
    %c6_64 = arith.constant 6 : index
    %c0_65 = arith.constant 0 : index
    %c0_66 = arith.constant 0 : index
    %92 = vector.load %arg10[%c6_64, %c0_65, %c0_66] : memref<8x8x4xbf16, #tpu.memory_space<vmem>>, vector<1x8x4xbf16>
    %93 = vector.shape_cast %92 : vector<1x8x4xbf16> to vector<8x4xbf16>
    %94 = vector.shape_cast %91 : vector<8x4xbf16> to vector<1x8x4xbf16>
    tpu.vector_store %arg10[%c6_64, %c0_65, %c0_66], %94 {strides = array<i32>} : memref<8x8x4xbf16, #tpu.memory_space<vmem>>, vector<1x8x4xbf16>,
    %95 = vector.extract_strided_slice %4 {offsets = [0, 28], sizes = [8, 4], strides = [1, 1]} : vector<8x32xbf16> to vector<8x4xbf16>
    %c7 = arith.constant 7 : index
    %c0_67 = arith.constant 0 : index
    %c0_68 = arith.constant 0 : index
    %96 = vector.load %arg8[%c7, %c0_67, %c0_68] : memref<8x8x4xbf16, #tpu.memory_space<vmem>>, vector<1x8x4xbf16>
    %97 = vector.shape_cast %96 : vector<1x8x4xbf16> to vector<8x4xbf16>
    %98 = vector.shape_cast %95 : vector<8x4xbf16> to vector<1x8x4xbf16>
    tpu.vector_store %arg8[%c7, %c0_67, %c0_68], %98 {strides = array<i32>} : memref<8x8x4xbf16, #tpu.memory_space<vmem>>, vector<1x8x4xbf16>,
    %99 = vector.extract_strided_slice %7 {offsets = [0, 28], sizes = [8, 4], strides = [1, 1]} : vector<8x32xbf16> to vector<8x4xbf16>
    %c7_69 = arith.constant 7 : index
    %c0_70 = arith.constant 0 : index
    %c0_71 = arith.constant 0 : index
    %100 = vector.load %arg9[%c7_69, %c0_70, %c0_71] : memref<8x8x4xbf16, #tpu.memory_space<vmem>>, vector<1x8x4xbf16>
    %101 = vector.shape_cast %100 : vector<1x8x4xbf16> to vector<8x4xbf16>
    %102 = vector.shape_cast %99 : vector<8x4xbf16> to vector<1x8x4xbf16>
    tpu.vector_store %arg9[%c7_69, %c0_70, %c0_71], %102 {strides = array<i32>} : memref<8x8x4xbf16, #tpu.memory_space<vmem>>, vector<1x8x4xbf16>,
    %103 = vector.extract_strided_slice %10 {offsets = [0, 28], sizes = [8, 4], strides = [1, 1]} : vector<8x32xbf16> to vector<8x4xbf16>
    %c7_72 = arith.constant 7 : index
    %c0_73 = arith.constant 0 : index
    %c0_74 = arith.constant 0 : index
    %104 = vector.load %arg10[%c7_72, %c0_73, %c0_74] : memref<8x8x4xbf16, #tpu.memory_space<vmem>>, vector<1x8x4xbf16>
    %105 = vector.shape_cast %104 : vector<1x8x4xbf16> to vector<8x4xbf16>
    %106 = vector.shape_cast %103 : vector<8x4xbf16> to vector<1x8x4xbf16>
    tpu.vector_store %arg10[%c7_72, %c0_73, %c0_74], %106 {strides = array<i32>} : memref<8x8x4xbf16, #tpu.memory_space<vmem>>, vector<1x8x4xbf16>,
    %c0_75 = arith.constant 0 : index
    %c0_76 = arith.constant 0 : index
    %c0_77 = arith.constant 0 : index
    %107 = vector.load %arg8[%c0_75, %c0_76, %c0_77] : memref<8x8x4xbf16, #tpu.memory_space<vmem>>, vector<8x8x4xbf16>
    %c0_78 = arith.constant 0 : index
    %c0_79 = arith.constant 0 : index
    %c0_80 = arith.constant 0 : index
    %108 = vector.load %arg9[%c0_78, %c0_79, %c0_80] : memref<8x8x4xbf16, #tpu.memory_space<vmem>>, vector<8x8x4xbf16>
    %c0_81 = arith.constant 0 : index
    %c0_82 = arith.constant 0 : index
    %c0_83 = arith.constant 0 : index
    %109 = vector.load %arg10[%c0_81, %c0_82, %c0_83] : memref<8x8x4xbf16, #tpu.memory_space<vmem>>, vector<8x8x4xbf16>
    "tpu.trace_start"() <{level = 10 : i32, message = "hqd,hkd->hqk"}> : () -> ()
    %cst_84 = arith.constant dense<0.000000e+00> : vector<8x8x8xf32>
    %110 = tpu.matmul %107, %108, %cst_84 {dimension_numbers = #tpu.dot_dimension_numbers<[2], [2], [1], [1], [0, 0, 0, 1, 1, 1], [0], [0]>} : vector<8x8x4xbf16>, vector<8x8x4xbf16>, vector<8x8x8xf32> -> vector<8x8x8xf32>
    "tpu.trace_stop"() : () -> ()
    %cst_85 = arith.constant dense<0xFF800000> : vector<8x8xf32>
    %111 = vector.multi_reduction <maximumf>, %110, %cst_85 [2] : vector<8x8x8xf32> to vector<8x8xf32>
    %112 = vector.shape_cast %111 : vector<8x8xf32> to vector<8x8x1xf32>
    %113 = vector.broadcast %112 : vector<8x8x1xf32> to vector<8x8x8xf32>
    %114 = arith.subf %110, %113 : vector<8x8x8xf32>
    %115 = math.exp %114 : vector<8x8x8xf32>
    %cst_86 = arith.constant dense<0.000000e+00> : vector<8x8xf32>
    %116 = vector.multi_reduction <add>, %115, %cst_86 [2] : vector<8x8x8xf32> to vector<8x8xf32>
    %117 = vector.shape_cast %116 : vector<8x8xf32> to vector<8x8x1xf32>
    %118 = tpu.reciprocal %117 {approx = true} : vector<8x8x1xf32> -> vector<8x8x1xf32>
    %119 = arith.truncf %115 : vector<8x8x8xf32> to vector<8x8x8xbf16>
    "tpu.trace_start"() <{level = 10 : i32, message = "hqk,hkd->hqd"}> : () -> ()
    %cst_87 = arith.constant dense<0.000000e+00> : vector<8x8x4xf32>
    %120 = tpu.matmul %119, %109, %cst_87 {dimension_numbers = #tpu.dot_dimension_numbers<[2], [1], [1], [2], [0, 0, 0, 1, 1, 2], [0], [0]>} : vector<8x8x8xbf16>, vector<8x8x4xbf16>, vector<8x8x4xf32> -> vector<8x8x4xf32>
    "tpu.trace_stop"() : () -> ()
    %121 = vector.broadcast %118 : vector<8x8x1xf32> to vector<8x8x4xf32>
    %122 = arith.mulf %120, %121 : vector<8x8x4xf32>
    %123 = arith.truncf %122 : vector<8x8x4xf32> to vector<8x8x4xbf16>
    %124 = vector.extract_strided_slice %123 {offsets = [0, 0, 0], sizes = [1, 8, 4], strides = [1, 1, 1]} : vector<8x8x4xbf16> to vector<1x8x4xbf16>
    %125 = vector.shape_cast %124 : vector<1x8x4xbf16> to vector<8x4xbf16>
    %c0_88 = arith.constant 0 : index
    %c0_89 = arith.constant 0 : index
    %126 = vector.load %arg11[%c0_88, %c0_89] : memref<8x32xbf16, #tpu.memory_space<vmem>>, vector<8x4xbf16>
    tpu.vector_store %arg11[%c0_88, %c0_89], %125 {strides = array<i32>} : memref<8x32xbf16, #tpu.memory_space<vmem>>, vector<8x4xbf16>,
    %127 = vector.extract_strided_slice %123 {offsets = [1, 0, 0], sizes = [1, 8, 4], strides = [1, 1, 1]} : vector<8x8x4xbf16> to vector<1x8x4xbf16>
    %128 = vector.shape_cast %127 : vector<1x8x4xbf16> to vector<8x4xbf16>
    %c0_90 = arith.constant 0 : index
    %c4_91 = arith.constant 4 : index
    %129 = vector.load %arg11[%c0_90, %c4_91] : memref<8x32xbf16, #tpu.memory_space<vmem>>, vector<8x4xbf16>
    tpu.vector_store %arg11[%c0_90, %c4_91], %128 {strides = array<i32>} : memref<8x32xbf16, #tpu.memory_space<vmem>>, vector<8x4xbf16>,
    %130 = vector.extract_strided_slice %123 {offsets = [2, 0, 0], sizes = [1, 8, 4], strides = [1, 1, 1]} : vector<8x8x4xbf16> to vector<1x8x4xbf16>
    %131 = vector.shape_cast %130 : vector<1x8x4xbf16> to vector<8x4xbf16>
    %c0_92 = arith.constant 0 : index
    %c8 = arith.constant 8 : index
    %132 = vector.load %arg11[%c0_92, %c8] : memref<8x32xbf16, #tpu.memory_space<vmem>>, vector<8x4xbf16>
    tpu.vector_store %arg11[%c0_92, %c8], %131 {strides = array<i32>} : memref<8x32xbf16, #tpu.memory_space<vmem>>, vector<8x4xbf16>,
    %133 = vector.extract_strided_slice %123 {offsets = [3, 0, 0], sizes = [1, 8, 4], strides = [1, 1, 1]} : vector<8x8x4xbf16> to vector<1x8x4xbf16>
    %134 = vector.shape_cast %133 : vector<1x8x4xbf16> to vector<8x4xbf16>
    %c0_93 = arith.constant 0 : index
    %c12 = arith.constant 12 : index
    %135 = vector.load %arg11[%c0_93, %c12] : memref<8x32xbf16, #tpu.memory_space<vmem>>, vector<8x4xbf16>
    tpu.vector_store %arg11[%c0_93, %c12], %134 {strides = array<i32>} : memref<8x32xbf16, #tpu.memory_space<vmem>>, vector<8x4xbf16>,
    %136 = vector.extract_strided_slice %123 {offsets = [4, 0, 0], sizes = [1, 8, 4], strides = [1, 1, 1]} : vector<8x8x4xbf16> to vector<1x8x4xbf16>
    %137 = vector.shape_cast %136 : vector<1x8x4xbf16> to vector<8x4xbf16>
    %c0_94 = arith.constant 0 : index
    %c16 = arith.constant 16 : index
    %138 = vector.load %arg11[%c0_94, %c16] : memref<8x32xbf16, #tpu.memory_space<vmem>>, vector<8x4xbf16>
    tpu.vector_store %arg11[%c0_94, %c16], %137 {strides = array<i32>} : memref<8x32xbf16, #tpu.memory_space<vmem>>, vector<8x4xbf16>,
    %139 = vector.extract_strided_slice %123 {offsets = [5, 0, 0], sizes = [1, 8, 4], strides = [1, 1, 1]} : vector<8x8x4xbf16> to vector<1x8x4xbf16>
    %140 = vector.shape_cast %139 : vector<1x8x4xbf16> to vector<8x4xbf16>
    %c0_95 = arith.constant 0 : index
    %c20 = arith.constant 20 : index
    %141 = vector.load %arg11[%c0_95, %c20] : memref<8x32xbf16, #tpu.memory_space<vmem>>, vector<8x4xbf16>
    tpu.vector_store %arg11[%c0_95, %c20], %140 {strides = array<i32>} : memref<8x32xbf16, #tpu.memory_space<vmem>>, vector<8x4xbf16>,
    %142 = vector.extract_strided_slice %123 {offsets = [6, 0, 0], sizes = [1, 8, 4], strides = [1, 1, 1]} : vector<8x8x4xbf16> to vector<1x8x4xbf16>
    %143 = vector.shape_cast %142 : vector<1x8x4xbf16> to vector<8x4xbf16>
    %c0_96 = arith.constant 0 : index
    %c24 = arith.constant 24 : index
    %144 = vector.load %arg11[%c0_96, %c24] : memref<8x32xbf16, #tpu.memory_space<vmem>>, vector<8x4xbf16>
    tpu.vector_store %arg11[%c0_96, %c24], %143 {strides = array<i32>} : memref<8x32xbf16, #tpu.memory_space<vmem>>, vector<8x4xbf16>,
    %145 = vector.extract_strided_slice %123 {offsets = [7, 0, 0], sizes = [1, 8, 4], strides = [1, 1, 1]} : vector<8x8x4xbf16> to vector<1x8x4xbf16>
    %146 = vector.shape_cast %145 : vector<1x8x4xbf16> to vector<8x4xbf16>
    %c0_97 = arith.constant 0 : index
    %c28 = arith.constant 28 : index
    %147 = vector.load %arg11[%c0_97, %c28] : memref<8x32xbf16, #tpu.memory_space<vmem>>, vector<8x4xbf16>
    tpu.vector_store %arg11[%c0_97, %c28], %146 {strides = array<i32>} : memref<8x32xbf16, #tpu.memory_space<vmem>>, vector<8x4xbf16>,
    %c0_98 = arith.constant 0 : index
    %c0_99 = arith.constant 0 : index
    %148 = vector.load %arg11[%c0_98, %c0_99] : memref<8x32xbf16, #tpu.memory_space<vmem>>, vector<8x32xbf16>
    %c0_100 = arith.constant 0 : index
    %c0_101 = arith.constant 0 : index
    %149 = vector.load %arg5[%c0_100, %c0_101] : memref<32x32xbf16, #tpu.memory_space<vmem>>, vector<32x32xbf16>
    %cst_102 = arith.constant dense<0.000000e+00> : vector<8x32xf32>
    %150 = tpu.matmul %148, %149, %cst_102 {dimension_numbers = #tpu.dot_dimension_numbers<[1], [0], [0], [1], [0, 0, 1, 1], [], []>} : vector<8x32xbf16>, vector<32x32xbf16>, vector<8x32xf32> -> vector<8x32xf32>
    %c0_103 = arith.constant 0 : index
    %c0_104 = arith.constant 0 : index
    %151 = vector.load %arg6[%c0_103, %c0_104] : memref<1x32xf32, #tpu.memory_space<vmem>>, vector<1x32xf32>
    %152 = vector.broadcast %151 : vector<1x32xf32> to vector<8x32xf32>
    %153 = arith.addf %150, %152 : vector<8x32xf32>
    %c0_105 = arith.constant 0 : index
    %c0_106 = arith.constant 0 : index
    %c0_107 = arith.constant 0 : index
    %154 = vector.load %arg7[%c0_105, %c0_106, %c0_107] : memref<1x8x32xf32, #tpu.memory_space<vmem>>, vector<1x8x32xf32>
    %155 = vector.shape_cast %154 : vector<1x8x32xf32> to vector<8x32xf32>
    %156 = vector.shape_cast %153 : vector<8x32xf32> to vector<1x8x32xf32>
    tpu.vector_store %arg7[%c0_105, %c0_106, %c0_107], %156 {strides = array<i32>} : memref<1x8x32xf32, #tpu.memory_space<vmem>>, vector<1x8x32xf32>,
    return
  }
  func.func @transform_0(%arg0: i32) -> (i32, i32, i32) {
    %c0_i32 = arith.constant 0 : i32
    %c0_i32_0 = arith.constant 0 : i32
    %c0_i32_1 = arith.constant 0 : i32
    return %arg0, %c0_i32, %c0_i32_0 : i32, i32, i32
  }
  func.func @transform_1(%arg0: i32) -> (i32, i32) {
    %c0_i32 = arith.constant 0 : i32
    %c0_i32_0 = arith.constant 0 : i32
    %c0_i32_1 = arith.constant 0 : i32
    return %c0_i32, %c0_i32_0 : i32, i32
  }
  func.func @transform_2(%arg0: i32) -> (i32, i32) {
    %c0_i32 = arith.constant 0 : i32
    %c0_i32_0 = arith.constant 0 : i32
    %c0_i32_1 = arith.constant 0 : i32
    return %c0_i32, %c0_i32_0 : i32, i32
  }
  func.func @transform_3(%arg0: i32) -> (i32, i32) {
    %c0_i32 = arith.constant 0 : i32
    %c0_i32_0 = arith.constant 0 : i32
    %c0_i32_1 = arith.constant 0 : i32
    return %c0_i32, %c0_i32_0 : i32, i32
  }
  func.func @transform_4(%arg0: i32) -> (i32, i32) {
    %c0_i32 = arith.constant 0 : i32
    %c0_i32_0 = arith.constant 0 : i32
    %c0_i32_1 = arith.constant 0 : i32
    return %c0_i32, %c0_i32_0 : i32, i32
  }
  func.func @transform_5(%arg0: i32) -> (i32, i32) {
    %c0_i32 = arith.constant 0 : i32
    %c0_i32_0 = arith.constant 0 : i32
    %c0_i32_1 = arith.constant 0 : i32
    return %c0_i32, %c0_i32_0 : i32, i32
  }
  func.func @transform_6(%arg0: i32) -> (i32, i32, i32) {
    %c0_i32 = arith.constant 0 : i32
    %c0_i32_0 = arith.constant 0 : i32
    %c0_i32_1 = arith.constant 0 : i32
    return %arg0, %c0_i32, %c0_i32_0 : i32, i32, i32
  }
}

</mosaic_0001>

<llo_original>
// kernel: tpu_custom_call.1
$region0: #{tpu_custom_call.1}
  #allocation0 [shape = 'u32[]', space=smem, size = 0x4, offset = 0x4, fixed_abs, tag = 'smem constant byte address 0x4 - core index']
  #allocation1 [shape = 'u32[144,128]{1,0:T(1,128)}', space=vmem, size = 0x12000, scoped, tag = 'internal scratch']
  #allocation2 [shape = 'bf16[8,8,4]{2,1,0:T(8,128)(2,1)}', space=vmem, size = 0x4000, scoped, tag = 'scratch operand']
  #allocation3 [shape = 'bf16[8,8,4]{2,1,0:T(8,128)(2,1)}', space=vmem, size = 0x4000, scoped, tag = 'scratch operand']
  #allocation4 [shape = 'bf16[8,8,4]{2,1,0:T(8,128)(2,1)}', space=vmem, size = 0x4000, scoped, tag = 'scratch operand']
  #allocation5 [shape = 'bf16[8,32]{1,0:T(8,128)(2,1)}', space=vmem, size = 0x800, scoped, tag = 'scratch operand']
  %s0 = inlined_call_operand.hbm [shape: bf16[2,8,32], index: 0, kind: input, shape index: {}]
  %s1 = inlined_call_operand.hbm [shape: bf16[32,32], index: 1, kind: input, shape index: {}]
  %s2 = inlined_call_operand.hbm [shape: bf16[32,32], index: 2, kind: input, shape index: {}]
  %s3 = inlined_call_operand.hbm [shape: bf16[32,32], index: 3, kind: input, shape index: {}]
  %s4 = inlined_call_operand.hbm [shape: bf16[32,32], index: 4, kind: input, shape index: {}]
  %s5 = inlined_call_operand.hbm [shape: f32[1,32], index: 5, kind: input, shape index: {}]
  %s6 = inlined_call_operand.hbm [shape: f32[2,8,32], index: 6, kind: output, shape index: {}]
  %s7 = sld [smem:[#allocation0]]
  $region81: #{tpu_custom_call.1} parent=0
    _
  %s9 = ssub.s32 1, %s7
  %s10 = scalar_select 0, %s9, %s7
  $region1: #{tpu_custom_call.1} parent=0
    #allocation6 [shape = 'u8[4096]{0}', space=vmem, size = 0x1000, scoped, tag = 'input window, operand 0']
    #allocation7 [shape = 's32[2]{0}', space=sflag, size = 0x8, scoped, tag = 'scoped memory for tpu_custom_call.1']
    #allocation8 [shape = 's32[2]{0}', space=sflag, size = 0x8, scoped, tag = 'scoped memory for tpu_custom_call.1']
    #allocation9 [shape = 'u8[8192]{0}', space=vmem, size = 0x2000, scoped, tag = 'input window, operand 1, single buffered']
    #allocation10 [shape = 's32[1]{0}', space=sflag, size = 0x4, scoped, tag = 'scoped memory for tpu_custom_call.1']
    #allocation11 [shape = 'u8[8192]{0}', space=vmem, size = 0x2000, scoped, tag = 'input window, operand 2, single buffered']
    #allocation12 [shape = 'u8[8192]{0}', space=vmem, size = 0x2000, scoped, tag = 'input window, operand 3, single buffered']
    #allocation13 [shape = 's32[1]{0}', space=sflag, size = 0x4, scoped, tag = 'scoped memory for tpu_custom_call.1']
    #allocation14 [shape = 'u8[8192]{0}', space=vmem, size = 0x2000, scoped, tag = 'input window, operand 4, single buffered']
    #allocation15 [shape = 'u8[512]{0}', space=vmem, size = 0x400, scoped, tag = 'input window, operand 5, single buffered']
    #allocation16 [shape = 's32[1]{0}', space=sflag, size = 0x4, scoped, tag = 'scoped memory for tpu_custom_call.1']
    #allocation17 [shape = 'u8[8192]{0}', space=vmem, size = 0x2000, scoped, tag = 'output window, operand 0']
    %11 = vsyncpa [#allocation7], 0
    %s12 = scalar_lea.sflag [#allocation7], 1
    %13 = vsyncpa %s12, 0
    %14 = vsyncpa [#allocation10], 0
    %15 = vsyncpa [#allocation13], 0
    %16 = vsyncpa [#allocation16], 0
    %17 = vsyncpa [#allocation8], 0
    %s18 = scalar_lea.sflag [#allocation8], 1
    %19 = vsyncpa %s18, 0
    loop: start=0, step=1, limit=4
    $region2: #{tpu_custom_call.1} parent=1 // loop_pre_header
      _
    $region3: #{tpu_custom_call.1} parent=1 // loop_header
      %s21 = sphi 0, %s25
      %p22 = scmp.ge.s32.totalorder %s21, 4
      %s31 = sphi 0, %s33
      %s34 = sphi 0, %s31
      %s35 = sphi 0, %s34
      %s51 = sphi 0, %s35
      %s55 = sphi 0, %s55
      %s57 = sphi 0, %s55
      %s58 = sphi 0, %s57
      %s72 = sphi 0, %s58
      %s76 = sphi 0, %s76
      %s78 = sphi 0, %s76
      %s79 = sphi 0, %s78
      %s93 = sphi 0, %s79
      %s97 = sphi 0, %s97
      %s99 = sphi 0, %s97
      %s100 = sphi 0, %s99
      %s114 = sphi 0, %s100
      %s118 = sphi 0, %s118
      %s120 = sphi 0, %s118
      %s121 = sphi 0, %s120
      %s135 = sphi 0, %s121
      %s139 = sphi 0, %s139
      %s141 = sphi 0, %s139
      %s142 = sphi 0, %s141
      %s156 = sphi 0, %s142
      %s162 = sphi 0, %s164
      %s165 = sphi 0, %s162
      %s166 = sphi 0, %s165
      %s182 = sphi 0, %s166
    $region4: #{tpu_custom_call.1} parent=1 // loop_header_branch
      %24 = sbr.rel (%p22) target = $region8
    $region5: #{tpu_custom_call.1} parent=1 // loop_body
      %s26 = ssub.s32 %s21, 1
      %s27 = ssub.s32 %s21, 2
      %s28 = sadd.s32 %s21, 1
      %s29 = ssub.s32 %s21, %s28
      %p30 = scmp.eq.s32.totalorder %s29, 0
      %s32 = sadd.s32 %s31, 1
      %s33 = scalar_select %p30, %s31, %s32
      %p36 = pneg %p30
      %p37 = scmp.eq.s32.totalorder %s21, 1
      %p38 = por %p36, %p37
      %p39 = scmp.ne.s32.totalorder %s31, %s34
      %p40 = scmp.eq.s32.totalorder %s21, 0
      %p41 = por %p39, %p40
      %p42 = scmp.ne.s32.totalorder %s31, %s34
      %p43 = scmp.eq.s32.totalorder %s26, 1
      %p44 = por %p42, %p43
      %p45 = scmp.ne.s32.totalorder %s34, %s35
      %p46 = scmp.eq.s32.totalorder %s26, 0
      %p47 = por %p45, %p46
      %p48 = scmp.ne.s32.totalorder %s34, %s35
      %p49 = scmp.eq.s32.totalorder %s27, 1
      %p50 = por %p48, %p49
      %p52 = scmp.ne.s32.totalorder %s35, %s51
      %p53 = scmp.eq.s32.totalorder %s27, 0
      %p54 = por %p52, %p53
      %s56 = sadd.s32 %s55, 1
      %p59 = scmp.eq.s32.totalorder %s21, 1
      %p60 = scmp.ne.s32.totalorder %s55, %s57
      %p61 = scmp.eq.s32.totalorder %s21, 0
      %p62 = por %p60, %p61
      %p63 = scmp.ne.s32.totalorder %s55, %s57
      %p64 = scmp.eq.s32.totalorder %s26, 1
      %p65 = por %p63, %p64
      %p66 = scmp.ne.s32.totalorder %s57, %s58
      %p67 = scmp.eq.s32.totalorder %s26, 0
      %p68 = por %p66, %p67
      %p69 = scmp.ne.s32.totalorder %s57, %s58
      %p70 = scmp.eq.s32.totalorder %s27, 1
      %p71 = por %p69, %p70
      %p73 = scmp.ne.s32.totalorder %s58, %s72
      %p74 = scmp.eq.s32.totalorder %s27, 0
      %p75 = por %p73, %p74
      %s77 = sadd.s32 %s76, 1
      %p80 = scmp.eq.s32.totalorder %s21, 1
      %p81 = scmp.ne.s32.totalorder %s76, %s78
      %p82 = scmp.eq.s32.totalorder %s21, 0
      %p83 = por %p81, %p82
      %p84 = scmp.ne.s32.totalorder %s76, %s78
      %p85 = scmp.eq.s32.totalorder %s26, 1
      %p86 = por %p84, %p85
      %p87 = scmp.ne.s32.totalorder %s78, %s79
      %p88 = scmp.eq.s32.totalorder %s26, 0
      %p89 = por %p87, %p88
      %p90 = scmp.ne.s32.totalorder %s78, %s79
      %p91 = scmp.eq.s32.totalorder %s27, 1
      %p92 = por %p90, %p91
      %p94 = scmp.ne.s32.totalorder %s79, %s93
      %p95 = scmp.eq.s32.totalorder %s27, 0
      %p96 = por %p94, %p95
      %s98 = sadd.s32 %s97, 1
      %p101 = scmp.eq.s32.totalorder %s21, 1
      %p102 = scmp.ne.s32.totalorder %s97, %s99
      %p103 = scmp.eq.s32.totalorder %s21, 0
      %p104 = por %p102, %p103
      %p105 = scmp.ne.s32.totalorder %s97, %s99
      %p106 = scmp.eq.s32.totalorder %s26, 1
      %p107 = por %p105, %p106
      %p108 = scmp.ne.s32.totalorder %s99, %s100
      %p109 = scmp.eq.s32.totalorder %s26, 0
      %p110 = por %p108, %p109
      %p111 = scmp.ne.s32.totalorder %s99, %s100
      %p112 = scmp.eq.s32.totalorder %s27, 1
      %p113 = por %p111, %p112
      %p115 = scmp.ne.s32.totalorder %s100, %s114
      %p116 = scmp.eq.s32.totalorder %s27, 0
      %p117 = por %p115, %p116
      %s119 = sadd.s32 %s118, 1
      %p122 = scmp.eq.s32.totalorder %s21, 1
      %p123 = scmp.ne.s32.totalorder %s118, %s120
      %p124 = scmp.eq.s32.totalorder %s21, 0
      %p125 = por %p123, %p124
      %p126 = scmp.ne.s32.totalorder %s118, %s120
      %p127 = scmp.eq.s32.totalorder %s26, 1
      %p128 = por %p126, %p127
      %p129 = scmp.ne.s32.totalorder %s120, %s121
      %p130 = scmp.eq.s32.totalorder %s26, 0
      %p131 = por %p129, %p130
      %p132 = scmp.ne.s32.totalorder %s120, %s121
      %p133 = scmp.eq.s32.totalorder %s27, 1
      %p134 = por %p132, %p133
      %p136 = scmp.ne.s32.totalorder %s121, %s135
      %p137 = scmp.eq.s32.totalorder %s27, 0
      %p138 = por %p136, %p137
      %s140 = sadd.s32 %s139, 1
      %p143 = scmp.eq.s32.totalorder %s21, 1
      %p144 = scmp.ne.s32.totalorder %s139, %s141
      %p145 = scmp.eq.s32.totalorder %s21, 0
      %p146 = por %p144, %p145
      %p147 = scmp.ne.s32.totalorder %s139, %s141
      %p148 = scmp.eq.s32.totalorder %s26, 1
      %p149 = por %p147, %p148
      %p150 = scmp.ne.s32.totalorder %s141, %s142
      %p151 = scmp.eq.s32.totalorder %s26, 0
      %p152 = por %p150, %p151
      %p153 = scmp.ne.s32.totalorder %s141, %s142
      %p154 = scmp.eq.s32.totalorder %s27, 1
      %p155 = por %p153, %p154
      %p157 = scmp.ne.s32.totalorder %s142, %s156
      %p158 = scmp.eq.s32.totalorder %s27, 0
      %p159 = por %p157, %p158
      %s160 = ssub.s32 %s21, %s28
      %p161 = scmp.eq.s32.totalorder %s160, 0
      %s163 = sadd.s32 %s162, 1
      %s164 = scalar_select %p161, %s162, %s163
      %p167 = pneg %p161
      %p168 = scmp.eq.s32.totalorder %s21, 1
      %p169 = por %p167, %p168
      %p170 = scmp.ne.s32.totalorder %s162, %s165
      %p171 = scmp.eq.s32.totalorder %s21, 0
      %p172 = por %p170, %p171
      %p173 = scmp.ne.s32.totalorder %s162, %s165
      %p174 = scmp.eq.s32.totalorder %s26, 1
      %p175 = por %p173, %p174
      %p176 = scmp.ne.s32.totalorder %s165, %s166
      %p177 = scmp.eq.s32.totalorder %s26, 0
      %p178 = por %p176, %p177
      %p179 = scmp.ne.s32.totalorder %s165, %s166
      %p180 = scmp.eq.s32.totalorder %s27, 1
      %p181 = por %p179, %p180
      %p183 = scmp.ne.s32.totalorder %s166, %s182
      %p184 = scmp.eq.s32.totalorder %s27, 0
      %p185 = por %p183, %p184
      %p186 = scmp.le.s32.totalorder 1, %s21
      %p187 = scmp.lt.s32.totalorder %s21, 3
      %p188 = pnand %p186, %p187
      %p189 = pneg %p188
      // Predicated region
      $region9: #{tpu_custom_call.1} parent=5 // pred_check
        _
      $region10: #{tpu_custom_call.1} parent=5 // pred_check_branch
        %191 = sbr.rel (%p188) target = $region12
      $region11: #{tpu_custom_call.1} parent=5 // pred_region
        %s192 = ssub.s32 %s21, 1
        // Predicated region
        $region13: #{tpu_custom_call.1} parent=11 // pred_check
          %p193 = pneg %p68
        $region14: #{tpu_custom_call.1} parent=11 // pred_check_branch
          %195 = sbr.rel (%p193) target = $region16
        $region15: #{tpu_custom_call.1} parent=11 // pred_region
          %s197 = ssub.s32 256, 256
          %198 = vsyncadd [#allocation10], %s197
          %s199 = sshll.u32 [#allocation9], 4
          %s200 = int_to_ptr.vmem [resolvable:$true] %s199
          %205 = dma.hbm_to_vmem [thread:$0]  %s1, 256, %s200, [#allocation10], 64, 64, 4
        $region16: #{tpu_custom_call.1} parent=11 // pred_fallthru
          _
        // Predicated region
        $region17: #{tpu_custom_call.1} parent=11 // pred_check
          %p206 = pneg %p89
        $region18: #{tpu_custom_call.1} parent=11 // pred_check_branch
          %208 = sbr.rel (%p206) target = $region20
        $region19: #{tpu_custom_call.1} parent=11 // pred_region
          %s210 = ssub.s32 256, 256
          %211 = vsyncadd [#allocation10], %s210
          %s212 = sshll.u32 [#allocation11], 4
          %s213 = int_to_ptr.vmem [resolvable:$true] %s212
          %218 = dma.hbm_to_vmem [thread:$0]  %s2, 256, %s213, [#allocation10], 64, 64, 4
        $region20: #{tpu_custom_call.1} parent=11 // pred_fallthru
          _
        // Predicated region
        $region21: #{tpu_custom_call.1} parent=11 // pred_check
          %p219 = pneg %p110
        $region22: #{tpu_custom_call.1} parent=11 // pred_check_branch
          %221 = sbr.rel (%p219) target = $region24
        $region23: #{tpu_custom_call.1} parent=11 // pred_region
          %s223 = ssub.s32 256, 256
          %224 = vsyncadd [#allocation13], %s223
          %s225 = sshll.u32 [#allocation12], 4
          %s226 = int_to_ptr.vmem [resolvable:$true] %s225
          %231 = dma.hbm_to_vmem [thread:$0]  %s3, 256, %s226, [#allocation13], 64, 64, 4
        $region24: #{tpu_custom_call.1} parent=11 // pred_fallthru
          _
        // Predicated region
        $region25: #{tpu_custom_call.1} parent=11 // pred_check
          %p232 = pneg %p131
        $region26: #{tpu_custom_call.1} parent=11 // pred_check_branch
          %234 = sbr.rel (%p232) target = $region28
        $region27: #{tpu_custom_call.1} parent=11 // pred_region
          %s236 = ssub.s32 256, 256
          %237 = vsyncadd [#allocation13], %s236
          %s238 = sshll.u32 [#allocation14], 4
          %s239 = int_to_ptr.vmem [resolvable:$true] %s238
          %244 = dma.hbm_to_vmem [thread:$0]  %s4, 256, %s239, [#allocation13], 64, 64, 4
        $region28: #{tpu_custom_call.1} parent=11 // pred_fallthru
          _
        // Predicated region
        $region29: #{tpu_custom_call.1} parent=11 // pred_check
          %p245 = pneg %p152
        $region30: #{tpu_custom_call.1} parent=11 // pred_check_branch
          %247 = sbr.rel (%p245) target = $region32
        $region31: #{tpu_custom_call.1} parent=11 // pred_region
          %s249 = ssub.s32 16, 16
          %250 = vsyncadd [#allocation16], %s249
          %s252 = sshll.u32 [#allocation15], 4
          %s253 = int_to_ptr.vmem [resolvable:$true] %s252
          %255 = dma.hbm_to_vmem [thread:$0]  %s5, 16, %s253, [#allocation16]
        $region32: #{tpu_custom_call.1} parent=11 // pred_fallthru
          _
      $region12: #{tpu_custom_call.1} parent=5 // pred_fallthru
        _
      %p256 = scmp.lt.s32.totalorder %s21, 2
      // Predicated region
      $region33: #{tpu_custom_call.1} parent=5 // pred_check
        %p257 = pneg %p256
      $region34: #{tpu_custom_call.1} parent=5 // pred_check_branch
        %259 = sbr.rel (%p257) target = $region36
      $region35: #{tpu_custom_call.1} parent=5 // pred_region
        // Predicated region
        $region37: #{tpu_custom_call.1} parent=35 // pred_check
          %p260 = pneg %p41
        $region38: #{tpu_custom_call.1} parent=35 // pred_check_branch
          %262 = sbr.rel (%p260) target = $region40
        $region39: #{tpu_custom_call.1} parent=35 // pred_region
          %s263 = sand.u32 %s31, 1
          %s264 = scalar_lea.sflag [#allocation7], %s263
          %s265 = sand.u32 %s31, 1
          %s266 = smul.addr %s265, 4
          %s267 = scalar_lea.vmem [#allocation6], %s266
          %s269 = ssub.s32 64, 64
          %270 = vsyncadd %s264, %s269
          %s271 = smul.addr %s21, 64
          %s272 = scalar_lea.hbm %s0, %s271
          %s274 = sshll.u32 %s267, 4
          %s275 = int_to_ptr.vmem [resolvable:$true] %s274
          %277 = dma.hbm_to_vmem [thread:$0]  %s272, 64, %s275, %s264
        $region40: #{tpu_custom_call.1} parent=35 // pred_fallthru
          _
      $region36: #{tpu_custom_call.1} parent=5 // pred_fallthru
        _
      %p278 = scmp.le.s32.totalorder 1, %s21
      %p279 = scmp.lt.s32.totalorder %s21, 3
      %p280 = pnand %p278, %p279
      %p281 = pneg %p280
      // Predicated region
      $region41: #{tpu_custom_call.1} parent=5 // pred_check
        _
      $region42: #{tpu_custom_call.1} parent=5 // pred_check_branch
        %283 = sbr.rel (%p280) target = $region44
      $region43: #{tpu_custom_call.1} parent=5 // pred_region
        %s284 = ssub.s32 %s21, 1
        %s285 = sand.u32 %s34, 1
        %s286 = scalar_lea.sflag [#allocation7], %s285
        %s287 = sand.u32 %s34, 1
        %s288 = smul.addr %s287, 4
        %s289 = scalar_lea.vmem [#allocation6], %s288
        // Predicated region
        $region45: #{tpu_custom_call.1} parent=43 // pred_check
          %p290 = pneg %p47
        $region46: #{tpu_custom_call.1} parent=43 // pred_check_branch
          %292 = sbr.rel (%p290) target = $region48
        $region47: #{tpu_custom_call.1} parent=43 // pred_region
          %293 = dma.done %s286, 64
        $region48: #{tpu_custom_call.1} parent=43 // pred_fallthru
          _
        // Predicated region
        $region49: #{tpu_custom_call.1} parent=43 // pred_check
          %p294 = pneg %p68
        $region50: #{tpu_custom_call.1} parent=43 // pred_check_branch
          %296 = sbr.rel (%p294) target = $region52
        $region51: #{tpu_custom_call.1} parent=43 // pred_region
          %297 = dma.done [#allocation10], 256
        $region52: #{tpu_custom_call.1} parent=43 // pred_fallthru
          _
        // Predicated region
        $region53: #{tpu_custom_call.1} parent=43 // pred_check
          %p298 = pneg %p89
        $region54: #{tpu_custom_call.1} parent=43 // pred_check_branch
          %300 = sbr.rel (%p298) target = $region56
        $region55: #{tpu_custom_call.1} parent=43 // pred_region
          %301 = dma.done [#allocation10], 256
        $region56: #{tpu_custom_call.1} parent=43 // pred_fallthru
          _
        // Predicated region
        $region57: #{tpu_custom_call.1} parent=43 // pred_check
          %p302 = pneg %p110
        $region58: #{tpu_custom_call.1} parent=43 // pred_check_branch
          %304 = sbr.rel (%p302) target = $region60
        $region59: #{tpu_custom_call.1} parent=43 // pred_region
          %305 = dma.done [#allocation13], 256
        $region60: #{tpu_custom_call.1} parent=43 // pred_fallthru
          _
        // Predicated region
        $region61: #{tpu_custom_call.1} parent=43 // pred_check
          %p306 = pneg %p131
        $region62: #{tpu_custom_call.1} parent=43 // pred_check_branch
          %308 = sbr.rel (%p306) target = $region64
        $region63: #{tpu_custom_call.1} parent=43 // pred_region
          %309 = dma.done [#allocation13], 256
        $region64: #{tpu_custom_call.1} parent=43 // pred_fallthru
          _
        // Predicated region
        $region65: #{tpu_custom_call.1} parent=43 // pred_check
          %p310 = pneg %p152
        $region66: #{tpu_custom_call.1} parent=43 // pred_check_branch
          %312 = sbr.rel (%p310) target = $region68
        $region67: #{tpu_custom_call.1} parent=43 // pred_region
          %313 = dma.done [#allocation16], 16
        $region68: #{tpu_custom_call.1} parent=43 // pred_fallthru
          _
        %s314 = sand.u32 %s34, 1
        %s315 = scalar_lea.sflag [#allocation7], %s314
        %s316 = sand.u32 %s34, 1
        %s317 = smul.addr %s316, 4
        %s318 = scalar_lea.vmem [#allocation6], %s317
        %p319 = pneg %p47
        %p320 = pneg %p44
        %p321 = pneg %p68
        %p322 = pneg %p65
        %p323 = pneg %p89
        %p324 = pneg %p86
        %p325 = pneg %p110
        %p326 = pneg %p107
        %p327 = pneg %p131
        %p328 = pneg %p128
        %p329 = pneg %p152
        %p330 = pneg %p149
        %p331 = pneg %p178
        %p332 = pneg %p175
        %s333 = sand.u32 %s165, 1
        %s334 = scalar_lea.sflag [#allocation8], %s333
        %s335 = sand.u32 %s165, 1
        %s336 = smul.addr %s335, 8
        %s337 = scalar_lea.vmem [#allocation17], %s336
        %v339 = vld [vmem:[%s289] sm:$0xf]
        %v340 = vld [vmem:[#allocation9] sm:$0xf]
        %v341 = vld [vmem:[#allocation9 + $0x4] sm:$0xf]
        %v342 = vld [vmem:[#allocation9 + $0x8] sm:$0xf]
        %v343 = vld [vmem:[#allocation9 + $0xc] sm:$0xf]
        %v348 = vunpack.c.l.b16 %v340
        %v349 = vunpack.c.l.b16 %v341
        %v350 = vunpack.c.l.b16 %v342
        %v351 = vunpack.c.l.b16 %v343
        %v352 = vpack.c.b16 %v349, %v348
        %v353 = vpack.c.b16 %v351, %v350
        %vm356 = vcmask 261120
        %v358 = vsel %vm356, %v339, 0
        %360 = vmatprep.subr.bf16.mxu0 0
        %361 = vmatpush1.bf16.msra.mxu0 %v352
        %362 = vmatprep.subr.bf16.mxu0 0
        %363 = vmatpush1.bf16.msra.mxu0 %v353
        %364 = vmatprep.subr.bf16.mxu0 0
        %365 = vmatpush1.bf16.msra.mxu0 0
        %366 = vmatprep.subr.bf16.mxu0 0
        %367 = vmatpush1.bf16.msra.mxu0 0
        %368 = vmatprep.subr.bf16.mxu0 0
        %369 = vmatpush1.bf16.msra.mxu0 0
        %370 = vmatprep.subr.bf16.mxu0 0
        %371 = vmatpush1.bf16.msra.mxu0 0
        %372 = vmatprep.subr.bf16.mxu0 0
        %373 = vmatpush1.bf16.msra.mxu0 0
        %374 = vmatprep.subr.bf16.mxu0 0
        %375 = vmatpush1.bf16.msra.mxu0 0
        %376 = vmatprep.subr.bf16.mxu0 0
        %377 = vmatpush1.bf16.msra.mxu0 0
        %378 = vmatprep.subr.bf16.mxu0 0
        %379 = vmatpush1.bf16.msra.mxu0 0
        %380 = vmatprep.subr.bf16.mxu0 0
        %381 = vmatpush1.bf16.msra.mxu0 0
        %382 = vmatprep.subr.bf16.mxu0 0
        %383 = vmatpush1.bf16.msra.mxu0 0
        %384 = vmatprep.subr.bf16.mxu0 0
        %385 = vmatpush1.bf16.msra.mxu0 0
        %386 = vmatprep.subr.bf16.mxu0 0
        %387 = vmatpush1.bf16.msra.mxu0 0
        %388 = vmatprep.subr.bf16.mxu0 0
        %389 = vmatpush1.bf16.msra.mxu0 0
        %390 = vmatprep.subr.bf16.mxu0 0
        %391 = vmatpush1.bf16.msra.mxu0 0
        %392 = vmatprep.mubr.bf16.mxu0 0
        %393 = vmatmul.mubr.bf16.gmra.mrb[0].mxu0 %v358
        %v394 = vpop.f32.mrb[0].mxu0
        %v395 = vadd.f32 0.0, %v394
        %v396 = vpop.f32.mrb[0].mxu0
        %v397 = vpop.f32.mrb[0].mxu0
        %v398 = vpop.f32.mrb[0].mxu0
        %399 = vdwg.mxu0
        %v400 = vpack.c.bf16 %v395, %v395
        %v401 = vld [vmem:[#allocation11] sm:$0xf]
        %v402 = vld [vmem:[#allocation11 + $0x4] sm:$0xf]
        %v403 = vld [vmem:[#allocation11 + $0x8] sm:$0xf]
        %v404 = vld [vmem:[#allocation11 + $0xc] sm:$0xf]
        %v409 = vunpack.c.l.b16 %v401
        %v410 = vunpack.c.l.b16 %v402
        %v411 = vunpack.c.l.b16 %v403
        %v412 = vunpack.c.l.b16 %v404
        %v413 = vpack.c.b16 %v410, %v409
        %v414 = vpack.c.b16 %v412, %v411
        %417 = vmatprep.subr.bf16.mxu0 0
        %418 = vmatpush1.bf16.msra.mxu0 %v413
        %419 = vmatprep.subr.bf16.mxu0 0
        %420 = vmatpush1.bf16.msra.mxu0 %v414
        %421 = vmatprep.subr.bf16.mxu0 0
        %422 = vmatpush1.bf16.msra.mxu0 0
        %423 = vmatprep.subr.bf16.mxu0 0
        %424 = vmatpush1.bf16.msra.mxu0 0
        %425 = vmatprep.subr.bf16.mxu0 0
        %426 = vmatpush1.bf16.msra.mxu0 0
        %427 = vmatprep.subr.bf16.mxu0 0
        %428 = vmatpush1.bf16.msra.mxu0 0
        %429 = vmatprep.subr.bf16.mxu0 0
        %430 = vmatpush1.bf16.msra.mxu0 0
        %431 = vmatprep.subr.bf16.mxu0 0
        %432 = vmatpush1.bf16.msra.mxu0 0
        %433 = vmatprep.subr.bf16.mxu0 0
        %434 = vmatpush1.bf16.msra.mxu0 0
        %435 = vmatprep.subr.bf16.mxu0 0
        %436 = vmatpush1.bf16.msra.mxu0 0
        %437 = vmatprep.subr.bf16.mxu0 0
        %438 = vmatpush1.bf16.msra.mxu0 0
        %439 = vmatprep.subr.bf16.mxu0 0
        %440 = vmatpush1.bf16.msra.mxu0 0
        %441 = vmatprep.subr.bf16.mxu0 0
        %442 = vmatpush1.bf16.msra.mxu0 0
        %443 = vmatprep.subr.bf16.mxu0 0
        %444 = vmatpush1.bf16.msra.mxu0 0
        %445 = vmatprep.subr.bf16.mxu0 0
        %446 = vmatpush1.bf16.msra.mxu0 0
        %447 = vmatprep.subr.bf16.mxu0 0
        %448 = vmatpush1.bf16.msra.mxu0 0
        %449 = vmatprep.mubr.bf16.mxu0 0
        %450 = vmatmul.mubr.bf16.gmra.mrb[0].mxu0 %v358
        %v451 = vpop.f32.mrb[0].mxu0
        %v452 = vadd.f32 0.0, %v451
        %v453 = vpop.f32.mrb[0].mxu0
        %v454 = vpop.f32.mrb[0].mxu0
        %v455 = vpop.f32.mrb[0].mxu0
        %456 = vdwg.mxu0
        %v457 = vpack.c.bf16 %v452, %v452
        %v458 = vld [vmem:[#allocation12] sm:$0xf]
        %v459 = vld [vmem:[#allocation12 + $0x4] sm:$0xf]
        %v460 = vld [vmem:[#allocation12 + $0x8] sm:$0xf]
        %v461 = vld [vmem:[#allocation12 + $0xc] sm:$0xf]
        %v466 = vunpack.c.l.b16 %v458
        %v467 = vunpack.c.l.b16 %v459
        %v468 = vunpack.c.l.b16 %v460
        %v469 = vunpack.c.l.b16 %v461
        %v470 = vpack.c.b16 %v467, %v466
        %v471 = vpack.c.b16 %v469, %v468
        %474 = vmatprep.subr.bf16.mxu0 0
        %475 = vmatpush1.bf16.msra.mxu0 %v470
        %476 = vmatprep.subr.bf16.mxu0 0
        %477 = vmatpush1.bf16.msra.mxu0 %v471
        %478 = vmatprep.subr.bf16.mxu0 0
        %479 = vmatpush1.bf16.msra.mxu0 0
        %480 = vmatprep.subr.bf16.mxu0 0
        %481 = vmatpush1.bf16.msra.mxu0 0
        %482 = vmatprep.subr.bf16.mxu0 0
        %483 = vmatpush1.bf16.msra.mxu0 0
        %484 = vmatprep.subr.bf16.mxu0 0
        %485 = vmatpush1.bf16.msra.mxu0 0
        %486 = vmatprep.subr.bf16.mxu0 0
        %487 = vmatpush1.bf16.msra.mxu0 0
        %488 = vmatprep.subr.bf16.mxu0 0
        %489 = vmatpush1.bf16.msra.mxu0 0
        %490 = vmatprep.subr.bf16.mxu0 0
        %491 = vmatpush1.bf16.msra.mxu0 0
        %492 = vmatprep.subr.bf16.mxu0 0
        %493 = vmatpush1.bf16.msra.mxu0 0
        %494 = vmatprep.subr.bf16.mxu0 0
        %495 = vmatpush1.bf16.msra.mxu0 0
        %496 = vmatprep.subr.bf16.mxu0 0
        %497 = vmatpush1.bf16.msra.mxu0 0
        %498 = vmatprep.subr.bf16.mxu0 0
        %499 = vmatpush1.bf16.msra.mxu0 0
        %500 = vmatprep.subr.bf16.mxu0 0
        %501 = vmatpush1.bf16.msra.mxu0 0
        %502 = vmatprep.subr.bf16.mxu0 0
        %503 = vmatpush1.bf16.msra.mxu0 0
        %504 = vmatprep.subr.bf16.mxu0 0
        %505 = vmatpush1.bf16.msra.mxu0 0
        %506 = vmatprep.mubr.bf16.mxu0 0
        %507 = vmatmul.mubr.bf16.gmra.mrb[0].mxu0 %v358
        %v508 = vpop.f32.mrb[0].mxu0
        %v509 = vadd.f32 0.0, %v508
        %v510 = vpop.f32.mrb[0].mxu0
        %v511 = vpop.f32.mrb[0].mxu0
        %v512 = vpop.f32.mrb[0].mxu0
        %513 = vdwg.mxu0
        %v514 = vpack.c.bf16 %v509, %v509
        %vm515 = vcmask 27648
        %516 = vst.msk [vmem:[#allocation2] sm:$0xf] %vm515, %v400
        %517 = vst.msk [vmem:[#allocation3] sm:$0xf] %vm515, %v457
        %518 = vst.msk [vmem:[#allocation4] sm:$0xf] %vm515, %v514
        %v520 = vunpack.c.l.b16 %v400
        %v521 = vpack.c.b16 %v520, %v520
        %522 = vrot.lane.b32.xlu0 %v521, 124
        %v523 = vpop.permute.xlu0 %522
        %s525 = scalar_lea.vmem [#allocation2], 4
        %526 = vst.msk [vmem:[%s525] sm:$0xf] %vm515, %v523
        %v528 = vunpack.c.l.b16 %v457
        %v529 = vpack.c.b16 %v528, %v528
        %530 = vrot.lane.b32.xlu0 %v529, 124
        %v531 = vpop.permute.xlu0 %530
        %s533 = scalar_lea.vmem [#allocation3], 4
        %534 = vst.msk [vmem:[%s533] sm:$0xf] %vm515, %v531
        %v536 = vunpack.c.l.b16 %v514
        %v537 = vpack.c.b16 %v536, %v536
        %538 = vrot.lane.b32.xlu0 %v537, 124
        %v539 = vpop.permute.xlu0 %538
        %s541 = scalar_lea.vmem [#allocation4], 4
        %542 = vst.msk [vmem:[%s541] sm:$0xf] %vm515, %v539
        %543 = vrot.lane.b32.xlu0 %v521, 120
        %v544 = vpop.permute.xlu0 %543
        %s546 = scalar_lea.vmem [#allocation2], 8
        %547 = vst.msk [vmem:[%s546] sm:$0xf] %vm515, %v544
        %548 = vrot.lane.b32.xlu0 %v529, 120
        %v549 = vpop.permute.xlu0 %548
        %s551 = scalar_lea.vmem [#allocation3], 8
        %552 = vst.msk [vmem:[%s551] sm:$0xf] %vm515, %v549
        %553 = vrot.lane.b32.xlu0 %v537, 120
        %v554 = vpop.permute.xlu0 %553
        %s556 = scalar_lea.vmem [#allocation4], 8
        %557 = vst.msk [vmem:[%s556] sm:$0xf] %vm515, %v554
        %558 = vrot.lane.b32.xlu0 %v521, 116
        %v559 = vpop.permute.xlu0 %558
        %s561 = scalar_lea.vmem [#allocation2], 12
        %562 = vst.msk [vmem:[%s561] sm:$0xf] %vm515, %v559
        %563 = vrot.lane.b32.xlu0 %v529, 116
        %v564 = vpop.permute.xlu0 %563
        %s566 = scalar_lea.vmem [#allocation3], 12
        %567 = vst.msk [vmem:[%s566] sm:$0xf] %vm515, %v564
        %568 = vrot.lane.b32.xlu0 %v537, 116
        %v569 = vpop.permute.xlu0 %568
        %s571 = scalar_lea.vmem [#allocation4], 12
        %572 = vst.msk [vmem:[%s571] sm:$0xf] %vm515, %v569
        %573 = vrot.lane.b32.xlu0 %v521, 112
        %v574 = vpop.permute.xlu0 %573
        %s576 = scalar_lea.vmem [#allocation2], 16
        %577 = vst.msk [vmem:[%s576] sm:$0xf] %vm515, %v574
        %578 = vrot.lane.b32.xlu0 %v529, 112
        %v579 = vpop.permute.xlu0 %578
        %s581 = scalar_lea.vmem [#allocation3], 16
        %582 = vst.msk [vmem:[%s581] sm:$0xf] %vm515, %v579
        %583 = vrot.lane.b32.xlu0 %v537, 112
        %v584 = vpop.permute.xlu0 %583
        %s586 = scalar_lea.vmem [#allocation4], 16
        %587 = vst.msk [vmem:[%s586] sm:$0xf] %vm515, %v584
        %588 = vrot.lane.b32.xlu0 %v521, 108
        %v589 = vpop.permute.xlu0 %588
        %s591 = scalar_lea.vmem [#allocation2], 20
        %592 = vst.msk [vmem:[%s591] sm:$0xf] %vm515, %v589
        %593 = vrot.lane.b32.xlu0 %v529, 108
        %v594 = vpop.permute.xlu0 %593
        %s596 = scalar_lea.vmem [#allocation3], 20
        %597 = vst.msk [vmem:[%s596] sm:$0xf] %vm515, %v594
        %598 = vrot.lane.b32.xlu0 %v537, 108
        %v599 = vpop.permute.xlu0 %598
        %s601 = scalar_lea.vmem [#allocation4], 20
        %602 = vst.msk [vmem:[%s601] sm:$0xf] %vm515, %v599
        %603 = vrot.lane.b32.xlu0 %v521, 104
        %v604 = vpop.permute.xlu0 %603
        %s606 = scalar_lea.vmem [#allocation2], 24
        %607 = vst.msk [vmem:[%s606] sm:$0xf] %vm515, %v604
        %608 = vrot.lane.b32.xlu0 %v529, 104
        %v609 = vpop.permute.xlu0 %608
        %s611 = scalar_lea.vmem [#allocation3], 24
        %612 = vst.msk [vmem:[%s611] sm:$0xf] %vm515, %v609
        %613 = vrot.lane.b32.xlu0 %v537, 104
        %v614 = vpop.permute.xlu0 %613
        %s616 = scalar_lea.vmem [#allocation4], 24
        %617 = vst.msk [vmem:[%s616] sm:$0xf] %vm515, %v614
        %618 = vrot.lane.b32.xlu0 %v521, 100
        %v619 = vpop.permute.xlu0 %618
        %s621 = scalar_lea.vmem [#allocation2], 28
        %622 = vst.msk [vmem:[%s621] sm:$0xf] %vm515, %v619
        %623 = vrot.lane.b32.xlu0 %v529, 100
        %v624 = vpop.permute.xlu0 %623
        %s626 = scalar_lea.vmem [#allocation3], 28
        %627 = vst.msk [vmem:[%s626] sm:$0xf] %vm515, %v624
        %628 = vrot.lane.b32.xlu0 %v537, 100
        %v629 = vpop.permute.xlu0 %628
        %s631 = scalar_lea.vmem [#allocation4], 28
        %632 = vst.msk [vmem:[%s631] sm:$0xf] %vm515, %v629
        %v633 = vld [vmem:[#allocation2] sm:$0xf]
        %v634 = vld [vmem:[#allocation2 + $0x4] sm:$0xf]
        %v635 = vld [vmem:[#allocation2 + $0x8] sm:$0xf]
        %v636 = vld [vmem:[#allocation2 + $0xc] sm:$0xf]
        %v637 = vld [vmem:[#allocation2 + $0x10] sm:$0xf]
        %v638 = vld [vmem:[#allocation2 + $0x14] sm:$0xf]
        %v639 = vld [vmem:[#allocation2 + $0x18] sm:$0xf]
        %v640 = vld [vmem:[#allocation2 + $0x1c] sm:$0xf]
        %v641 = vld [vmem:[#allocation3] sm:$0xf]
        %v642 = vld [vmem:[#allocation3 + $0x4] sm:$0xf]
        %v643 = vld [vmem:[#allocation3 + $0x8] sm:$0xf]
        %v644 = vld [vmem:[#allocation3 + $0xc] sm:$0xf]
        %v645 = vld [vmem:[#allocation3 + $0x10] sm:$0xf]
        %v646 = vld [vmem:[#allocation3 + $0x14] sm:$0xf]
        %v647 = vld [vmem:[#allocation3 + $0x18] sm:$0xf]
        %v648 = vld [vmem:[#allocation3 + $0x1c] sm:$0xf]
        %v649 = vld [vmem:[#allocation4] sm:$0xf]
        %v650 = vld [vmem:[#allocation4 + $0x4] sm:$0xf]
        %v651 = vld [vmem:[#allocation4 + $0x8] sm:$0xf]
        %v652 = vld [vmem:[#allocation4 + $0xc] sm:$0xf]
        %v653 = vld [vmem:[#allocation4 + $0x10] sm:$0xf]
        %v654 = vld [vmem:[#allocation4 + $0x14] sm:$0xf]
        %v655 = vld [vmem:[#allocation4 + $0x18] sm:$0xf]
        %v656 = vld [vmem:[#allocation4 + $0x1c] sm:$0xf]
        %vm657 = vcmask 31744
        %v659 = vsel %vm657, %v633, 0
        %v662 = vsel %vm657, %v641, 0
        %664 = vmatprep.subr.bf16.mxu0 0
        %665 = vmatpush1.bf16.xpose.msra.mxu0 %v662
        %666 = vmatprep.subr.bf16.mxu0 0
        %667 = vmatpush1.bf16.xpose.msra.mxu0 0
        %668 = vmatprep.subr.bf16.mxu0 0
        %669 = vmatpush1.bf16.xpose.msra.mxu0 0
        %670 = vmatprep.subr.bf16.mxu0 0
        %671 = vmatpush1.bf16.xpose.msra.mxu0 0
        %672 = vmatprep.subr.bf16.mxu0 0
        %673 = vmatpush1.bf16.xpose.msra.mxu0 0
        %674 = vmatprep.subr.bf16.mxu0 0
        %675 = vmatpush1.bf16.xpose.msra.mxu0 0
        %676 = vmatprep.subr.bf16.mxu0 0
        %677 = vmatpush1.bf16.xpose.msra.mxu0 0
        %678 = vmatprep.subr.bf16.mxu0 0
        %679 = vmatpush1.bf16.xpose.msra.mxu0 0
        %680 = vmatprep.subr.bf16.mxu0 0
        %681 = vmatpush1.bf16.xpose.msra.mxu0 0
        %682 = vmatprep.subr.bf16.mxu0 0
        %683 = vmatpush1.bf16.xpose.msra.mxu0 0
        %684 = vmatprep.subr.bf16.mxu0 0
        %685 = vmatpush1.bf16.xpose.msra.mxu0 0
        %686 = vmatprep.subr.bf16.mxu0 0
        %687 = vmatpush1.bf16.xpose.msra.mxu0 0
        %688 = vmatprep.subr.bf16.mxu0 0
        %689 = vmatpush1.bf16.xpose.msra.mxu0 0
        %690 = vmatprep.subr.bf16.mxu0 0
        %691 = vmatpush1.bf16.xpose.msra.mxu0 0
        %692 = vmatprep.subr.bf16.mxu0 0
        %693 = vmatpush1.bf16.xpose.msra.mxu0 0
        %694 = vmatprep.subr.bf16.mxu0 0
        %695 = vmatpush1.bf16.xpose.msra.mxu0 0
        %696 = vmatprep.mubr.bf16.mxu0 0
        %697 = vmatmul.mubr.bf16.gmra.mrb[0].mxu0 %v659
        %v698 = vpop.f32.mrb[0].mxu0
        %v699 = vadd.f32 0.0, %v698
        %v700 = vpop.f32.mrb[0].mxu0
        %v701 = vpop.f32.mrb[0].mxu0
        %v702 = vpop.f32.mrb[0].mxu0
        %703 = vdwg.mxu0
        %v705 = vsel %vm657, %v634, 0
        %v708 = vsel %vm657, %v642, 0
        %710 = vmatprep.subr.bf16.mxu0 0
        %711 = vmatpush1.bf16.xpose.msra.mxu0 %v708
        %712 = vmatprep.subr.bf16.mxu0 0
        %713 = vmatpush1.bf16.xpose.msra.mxu0 0
        %714 = vmatprep.subr.bf16.mxu0 0
        %715 = vmatpush1.bf16.xpose.msra.mxu0 0
        %716 = vmatprep.subr.bf16.mxu0 0
        %717 = vmatpush1.bf16.xpose.msra.mxu0 0
        %718 = vmatprep.subr.bf16.mxu0 0
        %719 = vmatpush1.bf16.xpose.msra.mxu0 0
        %720 = vmatprep.subr.bf16.mxu0 0
        %721 = vmatpush1.bf16.xpose.msra.mxu0 0
        %722 = vmatprep.subr.bf16.mxu0 0
        %723 = vmatpush1.bf16.xpose.msra.mxu0 0
        %724 = vmatprep.subr.bf16.mxu0 0
        %725 = vmatpush1.bf16.xpose.msra.mxu0 0
        %726 = vmatprep.subr.bf16.mxu0 0
        %727 = vmatpush1.bf16.xpose.msra.mxu0 0
        %728 = vmatprep.subr.bf16.mxu0 0
        %729 = vmatpush1.bf16.xpose.msra.mxu0 0
        %730 = vmatprep.subr.bf16.mxu0 0
        %731 = vmatpush1.bf16.xpose.msra.mxu0 0
        %732 = vmatprep.subr.bf16.mxu0 0
        %733 = vmatpush1.bf16.xpose.msra.mxu0 0
        %734 = vmatprep.subr.bf16.mxu0 0
        %735 = vmatpush1.bf16.xpose.msra.mxu0 0
        %736 = vmatprep.subr.bf16.mxu0 0
        %737 = vmatpush1.bf16.xpose.msra.mxu0 0
        %738 = vmatprep.subr.bf16.mxu0 0
        %739 = vmatpush1.bf16.xpose.msra.mxu0 0
        %740 = vmatprep.subr.bf16.mxu0 0
        %741 = vmatpush1.bf16.xpose.msra.mxu0 0
        %742 = vmatprep.mubr.bf16.mxu0 0
        %743 = vmatmul.mubr.bf16.gmra.mrb[0].mxu0 %v705
        %v744 = vpop.f32.mrb[0].mxu0
        %v745 = vadd.f32 0.0, %v744
        %v746 = vpop.f32.mrb[0].mxu0
        %v747 = vpop.f32.mrb[0].mxu0
        %v748 = vpop.f32.mrb[0].mxu0
        %749 = vdwg.mxu0
        %v751 = vsel %vm657, %v635, 0
        %v754 = vsel %vm657, %v643, 0
        %756 = vmatprep.subr.bf16.mxu0 0
        %757 = vmatpush1.bf16.xpose.msra.mxu0 %v754
        %758 = vmatprep.subr.bf16.mxu0 0
        %759 = vmatpush1.bf16.xpose.msra.mxu0 0
        %760 = vmatprep.subr.bf16.mxu0 0
        %761 = vmatpush1.bf16.xpose.msra.mxu0 0
        %762 = vmatprep.subr.bf16.mxu0 0
        %763 = vmatpush1.bf16.xpose.msra.mxu0 0
        %764 = vmatprep.subr.bf16.mxu0 0
        %765 = vmatpush1.bf16.xpose.msra.mxu0 0
        %766 = vmatprep.subr.bf16.mxu0 0
        %767 = vmatpush1.bf16.xpose.msra.mxu0 0
        %768 = vmatprep.subr.bf16.mxu0 0
        %769 = vmatpush1.bf16.xpose.msra.mxu0 0
        %770 = vmatprep.subr.bf16.mxu0 0
        %771 = vmatpush1.bf16.xpose.msra.mxu0 0
        %772 = vmatprep.subr.bf16.mxu0 0
        %773 = vmatpush1.bf16.xpose.msra.mxu0 0
        %774 = vmatprep.subr.bf16.mxu0 0
        %775 = vmatpush1.bf16.xpose.msra.mxu0 0
        %776 = vmatprep.subr.bf16.mxu0 0
        %777 = vmatpush1.bf16.xpose.msra.mxu0 0
        %778 = vmatprep.subr.bf16.mxu0 0
        %779 = vmatpush1.bf16.xpose.msra.mxu0 0
        %780 = vmatprep.subr.bf16.mxu0 0
        %781 = vmatpush1.bf16.xpose.msra.mxu0 0
        %782 = vmatprep.subr.bf16.mxu0 0
        %783 = vmatpush1.bf16.xpose.msra.mxu0 0
        %784 = vmatprep.subr.bf16.mxu0 0
        %785 = vmatpush1.bf16.xpose.msra.mxu0 0
        %786 = vmatprep.subr.bf16.mxu0 0
        %787 = vmatpush1.bf16.xpose.msra.mxu0 0
        %788 = vmatprep.mubr.bf16.mxu0 0
        %789 = vmatmul.mubr.bf16.gmra.mrb[0].mxu0 %v751
        %v790 = vpop.f32.mrb[0].mxu0
        %v791 = vadd.f32 0.0, %v790
        %v792 = vpop.f32.mrb[0].mxu0
        %v793 = vpop.f32.mrb[0].mxu0
        %v794 = vpop.f32.mrb[0].mxu0
        %795 = vdwg.mxu0
        %v797 = vsel %vm657, %v636, 0
        %v800 = vsel %vm657, %v644, 0
        %802 = vmatprep.subr.bf16.mxu0 0
        %803 = vmatpush1.bf16.xpose.msra.mxu0 %v800
        %804 = vmatprep.subr.bf16.mxu0 0
        %805 = vmatpush1.bf16.xpose.msra.mxu0 0
        %806 = vmatprep.subr.bf16.mxu0 0
        %807 = vmatpush1.bf16.xpose.msra.mxu0 0
        %808 = vmatprep.subr.bf16.mxu0 0
        %809 = vmatpush1.bf16.xpose.msra.mxu0 0
        %810 = vmatprep.subr.bf16.mxu0 0
        %811 = vmatpush1.bf16.xpose.msra.mxu0 0
        %812 = vmatprep.subr.bf16.mxu0 0
        %813 = vmatpush1.bf16.xpose.msra.mxu0 0
        %814 = vmatprep.subr.bf16.mxu0 0
        %815 = vmatpush1.bf16.xpose.msra.mxu0 0
        %816 = vmatprep.subr.bf16.mxu0 0
        %817 = vmatpush1.bf16.xpose.msra.mxu0 0
        %818 = vmatprep.subr.bf16.mxu0 0
        %819 = vmatpush1.bf16.xpose.msra.mxu0 0
        %820 = vmatprep.subr.bf16.mxu0 0
        %821 = vmatpush1.bf16.xpose.msra.mxu0 0
        %822 = vmatprep.subr.bf16.mxu0 0
        %823 = vmatpush1.bf16.xpose.msra.mxu0 0
        %824 = vmatprep.subr.bf16.mxu0 0
        %825 = vmatpush1.bf16.xpose.msra.mxu0 0
        %826 = vmatprep.subr.bf16.mxu0 0
        %827 = vmatpush1.bf16.xpose.msra.mxu0 0
        %828 = vmatprep.subr.bf16.mxu0 0
        %829 = vmatpush1.bf16.xpose.msra.mxu0 0
        %830 = vmatprep.subr.bf16.mxu0 0
        %831 = vmatpush1.bf16.xpose.msra.mxu0 0
        %832 = vmatprep.subr.bf16.mxu0 0
        %833 = vmatpush1.bf16.xpose.msra.mxu0 0
        %834 = vmatprep.mubr.bf16.mxu0 0
        %835 = vmatmul.mubr.bf16.gmra.mrb[0].mxu0 %v797
        %v836 = vpop.f32.mrb[0].mxu0
        %v837 = vadd.f32 0.0, %v836
        %v838 = vpop.f32.mrb[0].mxu0
        %v839 = vpop.f32.mrb[0].mxu0
        %v840 = vpop.f32.mrb[0].mxu0
        %841 = vdwg.mxu0
        %v843 = vsel %vm657, %v637, 0
        %v846 = vsel %vm657, %v645, 0
        %848 = vmatprep.subr.bf16.mxu0 0
        %849 = vmatpush1.bf16.xpose.msra.mxu0 %v846
        %850 = vmatprep.subr.bf16.mxu0 0
        %851 = vmatpush1.bf16.xpose.msra.mxu0 0
        %852 = vmatprep.subr.bf16.mxu0 0
        %853 = vmatpush1.bf16.xpose.msra.mxu0 0
        %854 = vmatprep.subr.bf16.mxu0 0
        %855 = vmatpush1.bf16.xpose.msra.mxu0 0
        %856 = vmatprep.subr.bf16.mxu0 0
        %857 = vmatpush1.bf16.xpose.msra.mxu0 0
        %858 = vmatprep.subr.bf16.mxu0 0
        %859 = vmatpush1.bf16.xpose.msra.mxu0 0
        %860 = vmatprep.subr.bf16.mxu0 0
        %861 = vmatpush1.bf16.xpose.msra.mxu0 0
        %862 = vmatprep.subr.bf16.mxu0 0
        %863 = vmatpush1.bf16.xpose.msra.mxu0 0
        %864 = vmatprep.subr.bf16.mxu0 0
        %865 = vmatpush1.bf16.xpose.msra.mxu0 0
        %866 = vmatprep.subr.bf16.mxu0 0
        %867 = vmatpush1.bf16.xpose.msra.mxu0 0
        %868 = vmatprep.subr.bf16.mxu0 0
        %869 = vmatpush1.bf16.xpose.msra.mxu0 0
        %870 = vmatprep.subr.bf16.mxu0 0
        %871 = vmatpush1.bf16.xpose.msra.mxu0 0
        %872 = vmatprep.subr.bf16.mxu0 0
        %873 = vmatpush1.bf16.xpose.msra.mxu0 0
        %874 = vmatprep.subr.bf16.mxu0 0
        %875 = vmatpush1.bf16.xpose.msra.mxu0 0
        %876 = vmatprep.subr.bf16.mxu0 0
        %877 = vmatpush1.bf16.xpose.msra.mxu0 0
        %878 = vmatprep.subr.bf16.mxu0 0
        %879 = vmatpush1.bf16.xpose.msra.mxu0 0
        %880 = vmatprep.mubr.bf16.mxu0 0
        %881 = vmatmul.mubr.bf16.gmra.mrb[0].mxu0 %v843
        %v882 = vpop.f32.mrb[0].mxu0
        %v883 = vadd.f32 0.0, %v882
        %v884 = vpop.f32.mrb[0].mxu0
        %v885 = vpop.f32.mrb[0].mxu0
        %v886 = vpop.f32.mrb[0].mxu0
        %887 = vdwg.mxu0
        %v889 = vsel %vm657, %v638, 0
        %v892 = vsel %vm657, %v646, 0
        %894 = vmatprep.subr.bf16.mxu0 0
        %895 = vmatpush1.bf16.xpose.msra.mxu0 %v892
        %896 = vmatprep.subr.bf16.mxu0 0
        %897 = vmatpush1.bf16.xpose.msra.mxu0 0
        %898 = vmatprep.subr.bf16.mxu0 0
        %899 = vmatpush1.bf16.xpose.msra.mxu0 0
        %900 = vmatprep.subr.bf16.mxu0 0
        %901 = vmatpush1.bf16.xpose.msra.mxu0 0
        %902 = vmatprep.subr.bf16.mxu0 0
        %903 = vmatpush1.bf16.xpose.msra.mxu0 0
        %904 = vmatprep.subr.bf16.mxu0 0
        %905 = vmatpush1.bf16.xpose.msra.mxu0 0
        %906 = vmatprep.subr.bf16.mxu0 0
        %907 = vmatpush1.bf16.xpose.msra.mxu0 0
        %908 = vmatprep.subr.bf16.mxu0 0
        %909 = vmatpush1.bf16.xpose.msra.mxu0 0
        %910 = vmatprep.subr.bf16.mxu0 0
        %911 = vmatpush1.bf16.xpose.msra.mxu0 0
        %912 = vmatprep.subr.bf16.mxu0 0
        %913 = vmatpush1.bf16.xpose.msra.mxu0 0
        %914 = vmatprep.subr.bf16.mxu0 0
        %915 = vmatpush1.bf16.xpose.msra.mxu0 0
        %916 = vmatprep.subr.bf16.mxu0 0
        %917 = vmatpush1.bf16.xpose.msra.mxu0 0
        %918 = vmatprep.subr.bf16.mxu0 0
        %919 = vmatpush1.bf16.xpose.msra.mxu0 0
        %920 = vmatprep.subr.bf16.mxu0 0
        %921 = vmatpush1.bf16.xpose.msra.mxu0 0
        %922 = vmatprep.subr.bf16.mxu0 0
        %923 = vmatpush1.bf16.xpose.msra.mxu0 0
        %924 = vmatprep.subr.bf16.mxu0 0
        %925 = vmatpush1.bf16.xpose.msra.mxu0 0
        %926 = vmatprep.mubr.bf16.mxu0 0
        %927 = vmatmul.mubr.bf16.gmra.mrb[0].mxu0 %v889
        %v928 = vpop.f32.mrb[0].mxu0
        %v929 = vadd.f32 0.0, %v928
        %v930 = vpop.f32.mrb[0].mxu0
        %v931 = vpop.f32.mrb[0].mxu0
        %v932 = vpop.f32.mrb[0].mxu0
        %933 = vdwg.mxu0
        %v935 = vsel %vm657, %v639, 0
        %v938 = vsel %vm657, %v647, 0
        %940 = vmatprep.subr.bf16.mxu0 0
        %941 = vmatpush1.bf16.xpose.msra.mxu0 %v938
        %942 = vmatprep.subr.bf16.mxu0 0
        %943 = vmatpush1.bf16.xpose.msra.mxu0 0
        %944 = vmatprep.subr.bf16.mxu0 0
        %945 = vmatpush1.bf16.xpose.msra.mxu0 0
        %946 = vmatprep.subr.bf16.mxu0 0
        %947 = vmatpush1.bf16.xpose.msra.mxu0 0
        %948 = vmatprep.subr.bf16.mxu0 0
        %949 = vmatpush1.bf16.xpose.msra.mxu0 0
        %950 = vmatprep.subr.bf16.mxu0 0
        %951 = vmatpush1.bf16.xpose.msra.mxu0 0
        %952 = vmatprep.subr.bf16.mxu0 0
        %953 = vmatpush1.bf16.xpose.msra.mxu0 0
        %954 = vmatprep.subr.bf16.mxu0 0
        %955 = vmatpush1.bf16.xpose.msra.mxu0 0
        %956 = vmatprep.subr.bf16.mxu0 0
        %957 = vmatpush1.bf16.xpose.msra.mxu0 0
        %958 = vmatprep.subr.bf16.mxu0 0
        %959 = vmatpush1.bf16.xpose.msra.mxu0 0
        %960 = vmatprep.subr.bf16.mxu0 0
        %961 = vmatpush1.bf16.xpose.msra.mxu0 0
        %962 = vmatprep.subr.bf16.mxu0 0
        %963 = vmatpush1.bf16.xpose.msra.mxu0 0
        %964 = vmatprep.subr.bf16.mxu0 0
        %965 = vmatpush1.bf16.xpose.msra.mxu0 0
        %966 = vmatprep.subr.bf16.mxu0 0
        %967 = vmatpush1.bf16.xpose.msra.mxu0 0
        %968 = vmatprep.subr.bf16.mxu0 0
        %969 = vmatpush1.bf16.xpose.msra.mxu0 0
        %970 = vmatprep.subr.bf16.mxu0 0
        %971 = vmatpush1.bf16.xpose.msra.mxu0 0
        %972 = vmatprep.mubr.bf16.mxu0 0
        %973 = vmatmul.mubr.bf16.gmra.mrb[0].mxu0 %v935
        %v974 = vpop.f32.mrb[0].mxu0
        %v975 = vadd.f32 0.0, %v974
        %v976 = vpop.f32.mrb[0].mxu0
        %v977 = vpop.f32.mrb[0].mxu0
        %v978 = vpop.f32.mrb[0].mxu0
        %979 = vdwg.mxu0
        %v981 = vsel %vm657, %v640, 0
        %v984 = vsel %vm657, %v648, 0
        %986 = vmatprep.subr.bf16.mxu0 0
        %987 = vmatpush1.bf16.xpose.msra.mxu0 %v984
        %988 = vmatprep.subr.bf16.mxu0 0
        %989 = vmatpush1.bf16.xpose.msra.mxu0 0
        %990 = vmatprep.subr.bf16.mxu0 0
        %991 = vmatpush1.bf16.xpose.msra.mxu0 0
        %992 = vmatprep.subr.bf16.mxu0 0
        %993 = vmatpush1.bf16.xpose.msra.mxu0 0
        %994 = vmatprep.subr.bf16.mxu0 0
        %995 = vmatpush1.bf16.xpose.msra.mxu0 0
        %996 = vmatprep.subr.bf16.mxu0 0
        %997 = vmatpush1.bf16.xpose.msra.mxu0 0
        %998 = vmatprep.subr.bf16.mxu0 0
        %999 = vmatpush1.bf16.xpose.msra.mxu0 0
        %1000 = vmatprep.subr.bf16.mxu0 0
        %1001 = vmatpush1.bf16.xpose.msra.mxu0 0
        %1002 = vmatprep.subr.bf16.mxu0 0
        %1003 = vmatpush1.bf16.xpose.msra.mxu0 0
        %1004 = vmatprep.subr.bf16.mxu0 0
        %1005 = vmatpush1.bf16.xpose.msra.mxu0 0
        %1006 = vmatprep.subr.bf16.mxu0 0
        %1007 = vmatpush1.bf16.xpose.msra.mxu0 0
        %1008 = vmatprep.subr.bf16.mxu0 0
        %1009 = vmatpush1.bf16.xpose.msra.mxu0 0
        %1010 = vmatprep.subr.bf16.mxu0 0
        %1011 = vmatpush1.bf16.xpose.msra.mxu0 0
        %1012 = vmatprep.subr.bf16.mxu0 0
        %1013 = vmatpush1.bf16.xpose.msra.mxu0 0
        %1014 = vmatprep.subr.bf16.mxu0 0
        %1015 = vmatpush1.bf16.xpose.msra.mxu0 0
        %1016 = vmatprep.subr.bf16.mxu0 0
        %1017 = vmatpush1.bf16.xpose.msra.mxu0 0
        %1018 = vmatprep.mubr.bf16.mxu0 0
        %1019 = vmatmul.mubr.bf16.gmra.mrb[0].mxu0 %v981
        %v1020 = vpop.f32.mrb[0].mxu0
        %v1021 = vadd.f32 0.0, %v1020
        %v1022 = vpop.f32.mrb[0].mxu0
        %v1023 = vpop.f32.mrb[0].mxu0
        %v1024 = vpop.f32.mrb[0].mxu0
        %1025 = vdwg.mxu0
        %vm1026 = vcmask 64512
        %v1027 = vsel %vm1026, %v699, -inf
        %1028 = vmax.xlane.f32.xlu0 %v1027
        %v1029 = vpop.xlane.xlu0 %1028
        %v1030 = vsel %vm1026, %v745, -inf
        %1031 = vmax.xlane.f32.xlu0 %v1030
        %v1032 = vpop.xlane.xlu0 %1031
        %v1033 = vsel %vm1026, %v791, -inf
        %1034 = vmax.xlane.f32.xlu0 %v1033
        %v1035 = vpop.xlane.xlu0 %1034
        %v1036 = vsel %vm1026, %v837, -inf
        %1037 = vmax.xlane.f32.xlu0 %v1036
        %v1038 = vpop.xlane.xlu0 %1037
        %v1039 = vsel %vm1026, %v883, -inf
        %1040 = vmax.xlane.f32.xlu0 %v1039
        %v1041 = vpop.xlane.xlu0 %1040
        %v1042 = vsel %vm1026, %v929, -inf
        %1043 = vmax.xlane.f32.xlu0 %v1042
        %v1044 = vpop.xlane.xlu0 %1043
        %v1045 = vsel %vm1026, %v975, -inf
        %1046 = vmax.xlane.f32.xlu0 %v1045
        %v1047 = vpop.xlane.xlu0 %1046
        %v1048 = vsel %vm1026, %v1021, -inf
        %1049 = vmax.xlane.f32.xlu0 %v1048
        %v1050 = vpop.xlane.xlu0 %1049
        %v1051 = vsub.f32 %v699, %v1029
        %v1052 = vsub.f32 %v745, %v1032
        %v1053 = vsub.f32 %v791, %v1035
        %v1054 = vsub.f32 %v837, %v1038
        %v1055 = vsub.f32 %v883, %v1041
        %v1056 = vsub.f32 %v929, %v1044
        %v1057 = vsub.f32 %v975, %v1047
        %v1058 = vsub.f32 %v1021, %v1050
        %v1059 = vmul.f32 %v1051, 1.442695
        %v1060 = vpow.pop %v1059
        %v1061 = vmul.f32 %v1052, 1.442695
        %v1062 = vpow.pop %v1061
        %v1063 = vmul.f32 %v1053, 1.442695
        %v1064 = vpow.pop %v1063
        %v1065 = vmul.f32 %v1054, 1.442695
        %v1066 = vpow.pop %v1065
        %v1067 = vmul.f32 %v1055, 1.442695
        %v1068 = vpow.pop %v1067
        %v1069 = vmul.f32 %v1056, 1.442695
        %v1070 = vpow.pop %v1069
        %v1071 = vmul.f32 %v1057, 1.442695
        %v1072 = vpow.pop %v1071
        %v1073 = vmul.f32 %v1058, 1.442695
        %v1074 = vpow.pop %v1073
        %v1075 = vsel %vm1026, %v1060, 0.0
        %1076 = vadd.xlane.f32.xlu0 %v1075
        %v1077 = vpop.xlane.xlu0 %1076
        %v1078 = vsel %vm1026, %v1062, 0.0
        %1079 = vadd.xlane.f32.xlu0 %v1078
        %v1080 = vpop.xlane.xlu0 %1079
        %v1081 = vsel %vm1026, %v1064, 0.0
        %1082 = vadd.xlane.f32.xlu0 %v1081
        %v1083 = vpop.xlane.xlu0 %1082
        %v1084 = vsel %vm1026, %v1066, 0.0
        %1085 = vadd.xlane.f32.xlu0 %v1084
        %v1086 = vpop.xlane.xlu0 %1085
        %v1087 = vsel %vm1026, %v1068, 0.0
        %1088 = vadd.xlane.f32.xlu0 %v1087
        %v1089 = vpop.xlane.xlu0 %1088
        %v1090 = vsel %vm1026, %v1070, 0.0
        %1091 = vadd.xlane.f32.xlu0 %v1090
        %v1092 = vpop.xlane.xlu0 %1091
        %v1093 = vsel %vm1026, %v1072, 0.0
        %1094 = vadd.xlane.f32.xlu0 %v1093
        %v1095 = vpop.xlane.xlu0 %1094
        %v1096 = vsel %vm1026, %v1074, 0.0
        %1097 = vadd.xlane.f32.xlu0 %v1096
        %v1098 = vpop.xlane.xlu0 %1097
        %v1099 = vrcp.pop %v1077
        %v1100 = vrcp.pop %v1080
        %v1101 = vrcp.pop %v1083
        %v1102 = vrcp.pop %v1086
        %v1103 = vrcp.pop %v1089
        %v1104 = vrcp.pop %v1092
        %v1105 = vrcp.pop %v1095
        %v1106 = vrcp.pop %v1098
        %v1107 = vpack.c.bf16 %v1060, %v1060
        %v1108 = vpack.c.bf16 %v1062, %v1062
        %v1109 = vpack.c.bf16 %v1064, %v1064
        %v1110 = vpack.c.bf16 %v1066, %v1066
        %v1111 = vpack.c.bf16 %v1068, %v1068
        %v1112 = vpack.c.bf16 %v1070, %v1070
        %v1113 = vpack.c.bf16 %v1072, %v1072
        %v1114 = vpack.c.bf16 %v1074, %v1074
        %v1116 = vsel %vm1026, %v1107, 0
        %vm1118 = vcmask 1043456
        %v1120 = vsel %vm1118, %v649, 0
        %1122 = vmatprep.subr.bf16.mxu0 0
        %1123 = vmatpush1.bf16.msra.mxu0 %v1120
        %1124 = vmatprep.subr.bf16.mxu0 0
        %1125 = vmatpush1.bf16.msra.mxu0 0
        %1126 = vmatprep.subr.bf16.mxu0 0
        %1127 = vmatpush1.bf16.msra.mxu0 0
        %1128 = vmatprep.subr.bf16.mxu0 0
        %1129 = vmatpush1.bf16.msra.mxu0 0
        %1130 = vmatprep.subr.bf16.mxu0 0
        %1131 = vmatpush1.bf16.msra.mxu0 0
        %1132 = vmatprep.subr.bf16.mxu0 0
        %1133 = vmatpush1.bf16.msra.mxu0 0
        %1134 = vmatprep.subr.bf16.mxu0 0
        %1135 = vmatpush1.bf16.msra.mxu0 0
        %1136 = vmatprep.subr.bf16.mxu0 0
        %1137 = vmatpush1.bf16.msra.mxu0 0
        %1138 = vmatprep.subr.bf16.mxu0 0
        %1139 = vmatpush1.bf16.msra.mxu0 0
        %1140 = vmatprep.subr.bf16.mxu0 0
        %1141 = vmatpush1.bf16.msra.mxu0 0
        %1142 = vmatprep.subr.bf16.mxu0 0
        %1143 = vmatpush1.bf16.msra.mxu0 0
        %1144 = vmatprep.subr.bf16.mxu0 0
        %1145 = vmatpush1.bf16.msra.mxu0 0
        %1146 = vmatprep.subr.bf16.mxu0 0
        %1147 = vmatpush1.bf16.msra.mxu0 0
        %1148 = vmatprep.subr.bf16.mxu0 0
        %1149 = vmatpush1.bf16.msra.mxu0 0
        %1150 = vmatprep.subr.bf16.mxu0 0
        %1151 = vmatpush1.bf16.msra.mxu0 0
        %1152 = vmatprep.subr.bf16.mxu0 0
        %1153 = vmatpush1.bf16.msra.mxu0 0
        %1154 = vmatprep.mubr.bf16.mxu0 0
        %1155 = vmatmul.mubr.bf16.gmra.mrb[0].mxu0 %v1116
        %v1156 = vpop.f32.mrb[0].mxu0
        %v1157 = vadd.f32 0.0, %v1156
        %v1158 = vpop.f32.mrb[0].mxu0
        %v1159 = vpop.f32.mrb[0].mxu0
        %v1160 = vpop.f32.mrb[0].mxu0
        %1161 = vdwg.mxu0
        %v1163 = vsel %vm1026, %v1108, 0
        %v1166 = vsel %vm1118, %v650, 0
        %1168 = vmatprep.subr.bf16.mxu0 0
        %1169 = vmatpush1.bf16.msra.mxu0 %v1166
        %1170 = vmatprep.subr.bf16.mxu0 0
        %1171 = vmatpush1.bf16.msra.mxu0 0
        %1172 = vmatprep.subr.bf16.mxu0 0
        %1173 = vmatpush1.bf16.msra.mxu0 0
        %1174 = vmatprep.subr.bf16.mxu0 0
        %1175 = vmatpush1.bf16.msra.mxu0 0
        %1176 = vmatprep.subr.bf16.mxu0 0
        %1177 = vmatpush1.bf16.msra.mxu0 0
        %1178 = vmatprep.subr.bf16.mxu0 0
        %1179 = vmatpush1.bf16.msra.mxu0 0
        %1180 = vmatprep.subr.bf16.mxu0 0
        %1181 = vmatpush1.bf16.msra.mxu0 0
        %1182 = vmatprep.subr.bf16.mxu0 0
        %1183 = vmatpush1.bf16.msra.mxu0 0
        %1184 = vmatprep.subr.bf16.mxu0 0
        %1185 = vmatpush1.bf16.msra.mxu0 0
        %1186 = vmatprep.subr.bf16.mxu0 0
        %1187 = vmatpush1.bf16.msra.mxu0 0
        %1188 = vmatprep.subr.bf16.mxu0 0
        %1189 = vmatpush1.bf16.msra.mxu0 0
        %1190 = vmatprep.subr.bf16.mxu0 0
        %1191 = vmatpush1.bf16.msra.mxu0 0
        %1192 = vmatprep.subr.bf16.mxu0 0
        %1193 = vmatpush1.bf16.msra.mxu0 0
        %1194 = vmatprep.subr.bf16.mxu0 0
        %1195 = vmatpush1.bf16.msra.mxu0 0
        %1196 = vmatprep.subr.bf16.mxu0 0
        %1197 = vmatpush1.bf16.msra.mxu0 0
        %1198 = vmatprep.subr.bf16.mxu0 0
        %1199 = vmatpush1.bf16.msra.mxu0 0
        %1200 = vmatprep.mubr.bf16.mxu0 0
        %1201 = vmatmul.mubr.bf16.gmra.mrb[0].mxu0 %v1163
        %v1202 = vpop.f32.mrb[0].mxu0
        %v1203 = vadd.f32 0.0, %v1202
        %v1204 = vpop.f32.mrb[0].mxu0
        %v1205 = vpop.f32.mrb[0].mxu0
        %v1206 = vpop.f32.mrb[0].mxu0
        %1207 = vdwg.mxu0
        %v1209 = vsel %vm1026, %v1109, 0
        %v1212 = vsel %vm1118, %v651, 0
        %1214 = vmatprep.subr.bf16.mxu0 0
        %1215 = vmatpush1.bf16.msra.mxu0 %v1212
        %1216 = vmatprep.subr.bf16.mxu0 0
        %1217 = vmatpush1.bf16.msra.mxu0 0
        %1218 = vmatprep.subr.bf16.mxu0 0
        %1219 = vmatpush1.bf16.msra.mxu0 0
        %1220 = vmatprep.subr.bf16.mxu0 0
        %1221 = vmatpush1.bf16.msra.mxu0 0
        %1222 = vmatprep.subr.bf16.mxu0 0
        %1223 = vmatpush1.bf16.msra.mxu0 0
        %1224 = vmatprep.subr.bf16.mxu0 0
        %1225 = vmatpush1.bf16.msra.mxu0 0
        %1226 = vmatprep.subr.bf16.mxu0 0
        %1227 = vmatpush1.bf16.msra.mxu0 0
        %1228 = vmatprep.subr.bf16.mxu0 0
        %1229 = vmatpush1.bf16.msra.mxu0 0
        %1230 = vmatprep.subr.bf16.mxu0 0
        %1231 = vmatpush1.bf16.msra.mxu0 0
        %1232 = vmatprep.subr.bf16.mxu0 0
        %1233 = vmatpush1.bf16.msra.mxu0 0
        %1234 = vmatprep.subr.bf16.mxu0 0
        %1235 = vmatpush1.bf16.msra.mxu0 0
        %1236 = vmatprep.subr.bf16.mxu0 0
        %1237 = vmatpush1.bf16.msra.mxu0 0
        %1238 = vmatprep.subr.bf16.mxu0 0
        %1239 = vmatpush1.bf16.msra.mxu0 0
        %1240 = vmatprep.subr.bf16.mxu0 0
        %1241 = vmatpush1.bf16.msra.mxu0 0
        %1242 = vmatprep.subr.bf16.mxu0 0
        %1243 = vmatpush1.bf16.msra.mxu0 0
        %1244 = vmatprep.subr.bf16.mxu0 0
        %1245 = vmatpush1.bf16.msra.mxu0 0
        %1246 = vmatprep.mubr.bf16.mxu0 0
        %1247 = vmatmul.mubr.bf16.gmra.mrb[0].mxu0 %v1209
        %v1248 = vpop.f32.mrb[0].mxu0
        %v1249 = vadd.f32 0.0, %v1248
        %v1250 = vpop.f32.mrb[0].mxu0
        %v1251 = vpop.f32.mrb[0].mxu0
        %v1252 = vpop.f32.mrb[0].mxu0
        %1253 = vdwg.mxu0
        %v1255 = vsel %vm1026, %v1110, 0
        %v1258 = vsel %vm1118, %v652, 0
        %1260 = vmatprep.subr.bf16.mxu0 0
        %1261 = vmatpush1.bf16.msra.mxu0 %v1258
        %1262 = vmatprep.subr.bf16.mxu0 0
        %1263 = vmatpush1.bf16.msra.mxu0 0
        %1264 = vmatprep.subr.bf16.mxu0 0
        %1265 = vmatpush1.bf16.msra.mxu0 0
        %1266 = vmatprep.subr.bf16.mxu0 0
        %1267 = vmatpush1.bf16.msra.mxu0 0
        %1268 = vmatprep.subr.bf16.mxu0 0
        %1269 = vmatpush1.bf16.msra.mxu0 0
        %1270 = vmatprep.subr.bf16.mxu0 0
        %1271 = vmatpush1.bf16.msra.mxu0 0
        %1272 = vmatprep.subr.bf16.mxu0 0
        %1273 = vmatpush1.bf16.msra.mxu0 0
        %1274 = vmatprep.subr.bf16.mxu0 0
        %1275 = vmatpush1.bf16.msra.mxu0 0
        %1276 = vmatprep.subr.bf16.mxu0 0
        %1277 = vmatpush1.bf16.msra.mxu0 0
        %1278 = vmatprep.subr.bf16.mxu0 0
        %1279 = vmatpush1.bf16.msra.mxu0 0
        %1280 = vmatprep.subr.bf16.mxu0 0
        %1281 = vmatpush1.bf16.msra.mxu0 0
        %1282 = vmatprep.subr.bf16.mxu0 0
        %1283 = vmatpush1.bf16.msra.mxu0 0
        %1284 = vmatprep.subr.bf16.mxu0 0
        %1285 = vmatpush1.bf16.msra.mxu0 0
        %1286 = vmatprep.subr.bf16.mxu0 0
        %1287 = vmatpush1.bf16.msra.mxu0 0
        %1288 = vmatprep.subr.bf16.mxu0 0
        %1289 = vmatpush1.bf16.msra.mxu0 0
        %1290 = vmatprep.subr.bf16.mxu0 0
        %1291 = vmatpush1.bf16.msra.mxu0 0
        %1292 = vmatprep.mubr.bf16.mxu0 0
        %1293 = vmatmul.mubr.bf16.gmra.mrb[0].mxu0 %v1255
        %v1294 = vpop.f32.mrb[0].mxu0
        %v1295 = vadd.f32 0.0, %v1294
        %v1296 = vpop.f32.mrb[0].mxu0
        %v1297 = vpop.f32.mrb[0].mxu0
        %v1298 = vpop.f32.mrb[0].mxu0
        %1299 = vdwg.mxu0
        %v1301 = vsel %vm1026, %v1111, 0
        %v1304 = vsel %vm1118, %v653, 0
        %1306 = vmatprep.subr.bf16.mxu0 0
        %1307 = vmatpush1.bf16.msra.mxu0 %v1304
        %1308 = vmatprep.subr.bf16.mxu0 0
        %1309 = vmatpush1.bf16.msra.mxu0 0
        %1310 = vmatprep.subr.bf16.mxu0 0
        %1311 = vmatpush1.bf16.msra.mxu0 0
        %1312 = vmatprep.subr.bf16.mxu0 0
        %1313 = vmatpush1.bf16.msra.mxu0 0
        %1314 = vmatprep.subr.bf16.mxu0 0
        %1315 = vmatpush1.bf16.msra.mxu0 0
        %1316 = vmatprep.subr.bf16.mxu0 0
        %1317 = vmatpush1.bf16.msra.mxu0 0
        %1318 = vmatprep.subr.bf16.mxu0 0
        %1319 = vmatpush1.bf16.msra.mxu0 0
        %1320 = vmatprep.subr.bf16.mxu0 0
        %1321 = vmatpush1.bf16.msra.mxu0 0
        %1322 = vmatprep.subr.bf16.mxu0 0
        %1323 = vmatpush1.bf16.msra.mxu0 0
        %1324 = vmatprep.subr.bf16.mxu0 0
        %1325 = vmatpush1.bf16.msra.mxu0 0
        %1326 = vmatprep.subr.bf16.mxu0 0
        %1327 = vmatpush1.bf16.msra.mxu0 0
        %1328 = vmatprep.subr.bf16.mxu0 0
        %1329 = vmatpush1.bf16.msra.mxu0 0
        %1330 = vmatprep.subr.bf16.mxu0 0
        %1331 = vmatpush1.bf16.msra.mxu0 0
        %1332 = vmatprep.subr.bf16.mxu0 0
        %1333 = vmatpush1.bf16.msra.mxu0 0
        %1334 = vmatprep.subr.bf16.mxu0 0
        %1335 = vmatpush1.bf16.msra.mxu0 0
        %1336 = vmatprep.subr.bf16.mxu0 0
        %1337 = vmatpush1.bf16.msra.mxu0 0
        %1338 = vmatprep.mubr.bf16.mxu0 0
        %1339 = vmatmul.mubr.bf16.gmra.mrb[0].mxu0 %v1301
        %v1340 = vpop.f32.mrb[0].mxu0
        %v1341 = vadd.f32 0.0, %v1340
        %v1342 = vpop.f32.mrb[0].mxu0
        %v1343 = vpop.f32.mrb[0].mxu0
        %v1344 = vpop.f32.mrb[0].mxu0
        %1345 = vdwg.mxu0
        %v1347 = vsel %vm1026, %v1112, 0
        %v1350 = vsel %vm1118, %v654, 0
        %1352 = vmatprep.subr.bf16.mxu0 0
        %1353 = vmatpush1.bf16.msra.mxu0 %v1350
        %1354 = vmatprep.subr.bf16.mxu0 0
        %1355 = vmatpush1.bf16.msra.mxu0 0
        %1356 = vmatprep.subr.bf16.mxu0 0
        %1357 = vmatpush1.bf16.msra.mxu0 0
        %1358 = vmatprep.subr.bf16.mxu0 0
        %1359 = vmatpush1.bf16.msra.mxu0 0
        %1360 = vmatprep.subr.bf16.mxu0 0
        %1361 = vmatpush1.bf16.msra.mxu0 0
        %1362 = vmatprep.subr.bf16.mxu0 0
        %1363 = vmatpush1.bf16.msra.mxu0 0
        %1364 = vmatprep.subr.bf16.mxu0 0
        %1365 = vmatpush1.bf16.msra.mxu0 0
        %1366 = vmatprep.subr.bf16.mxu0 0
        %1367 = vmatpush1.bf16.msra.mxu0 0
        %1368 = vmatprep.subr.bf16.mxu0 0
        %1369 = vmatpush1.bf16.msra.mxu0 0
        %1370 = vmatprep.subr.bf16.mxu0 0
        %1371 = vmatpush1.bf16.msra.mxu0 0
        %1372 = vmatprep.subr.bf16.mxu0 0
        %1373 = vmatpush1.bf16.msra.mxu0 0
        %1374 = vmatprep.subr.bf16.mxu0 0
        %1375 = vmatpush1.bf16.msra.mxu0 0
        %1376 = vmatprep.subr.bf16.mxu0 0
        %1377 = vmatpush1.bf16.msra.mxu0 0
        %1378 = vmatprep.subr.bf16.mxu0 0
        %1379 = vmatpush1.bf16.msra.mxu0 0
        %1380 = vmatprep.subr.bf16.mxu0 0
        %1381 = vmatpush1.bf16.msra.mxu0 0
        %1382 = vmatprep.subr.bf16.mxu0 0
        %1383 = vmatpush1.bf16.msra.mxu0 0
        %1384 = vmatprep.mubr.bf16.mxu0 0
        %1385 = vmatmul.mubr.bf16.gmra.mrb[0].mxu0 %v1347
        %v1386 = vpop.f32.mrb[0].mxu0
        %v1387 = vadd.f32 0.0, %v1386
        %v1388 = vpop.f32.mrb[0].mxu0
        %v1389 = vpop.f32.mrb[0].mxu0
        %v1390 = vpop.f32.mrb[0].mxu0
        %1391 = vdwg.mxu0
        %v1393 = vsel %vm1026, %v1113, 0
        %v1396 = vsel %vm1118, %v655, 0
        %1398 = vmatprep.subr.bf16.mxu0 0
        %1399 = vmatpush1.bf16.msra.mxu0 %v1396
        %1400 = vmatprep.subr.bf16.mxu0 0
        %1401 = vmatpush1.bf16.msra.mxu0 0
        %1402 = vmatprep.subr.bf16.mxu0 0
        %1403 = vmatpush1.bf16.msra.mxu0 0
        %1404 = vmatprep.subr.bf16.mxu0 0
        %1405 = vmatpush1.bf16.msra.mxu0 0
        %1406 = vmatprep.subr.bf16.mxu0 0
        %1407 = vmatpush1.bf16.msra.mxu0 0
        %1408 = vmatprep.subr.bf16.mxu0 0
        %1409 = vmatpush1.bf16.msra.mxu0 0
        %1410 = vmatprep.subr.bf16.mxu0 0
        %1411 = vmatpush1.bf16.msra.mxu0 0
        %1412 = vmatprep.subr.bf16.mxu0 0
        %1413 = vmatpush1.bf16.msra.mxu0 0
        %1414 = vmatprep.subr.bf16.mxu0 0
        %1415 = vmatpush1.bf16.msra.mxu0 0
        %1416 = vmatprep.subr.bf16.mxu0 0
        %1417 = vmatpush1.bf16.msra.mxu0 0
        %1418 = vmatprep.subr.bf16.mxu0 0
        %1419 = vmatpush1.bf16.msra.mxu0 0
        %1420 = vmatprep.subr.bf16.mxu0 0
        %1421 = vmatpush1.bf16.msra.mxu0 0
        %1422 = vmatprep.subr.bf16.mxu0 0
        %1423 = vmatpush1.bf16.msra.mxu0 0
        %1424 = vmatprep.subr.bf16.mxu0 0
        %1425 = vmatpush1.bf16.msra.mxu0 0
        %1426 = vmatprep.subr.bf16.mxu0 0
        %1427 = vmatpush1.bf16.msra.mxu0 0
        %1428 = vmatprep.subr.bf16.mxu0 0
        %1429 = vmatpush1.bf16.msra.mxu0 0
        %1430 = vmatprep.mubr.bf16.mxu0 0
        %1431 = vmatmul.mubr.bf16.gmra.mrb[0].mxu0 %v1393
        %v1432 = vpop.f32.mrb[0].mxu0
        %v1433 = vadd.f32 0.0, %v1432
        %v1434 = vpop.f32.mrb[0].mxu0
        %v1435 = vpop.f32.mrb[0].mxu0
        %v1436 = vpop.f32.mrb[0].mxu0
        %1437 = vdwg.mxu0
        %v1439 = vsel %vm1026, %v1114, 0
        %v1442 = vsel %vm1118, %v656, 0
        %1444 = vmatprep.subr.bf16.mxu0 0
        %1445 = vmatpush1.bf16.msra.mxu0 %v1442
        %1446 = vmatprep.subr.bf16.mxu0 0
        %1447 = vmatpush1.bf16.msra.mxu0 0
        %1448 = vmatprep.subr.bf16.mxu0 0
        %1449 = vmatpush1.bf16.msra.mxu0 0
        %1450 = vmatprep.subr.bf16.mxu0 0
        %1451 = vmatpush1.bf16.msra.mxu0 0
        %1452 = vmatprep.subr.bf16.mxu0 0
        %1453 = vmatpush1.bf16.msra.mxu0 0
        %1454 = vmatprep.subr.bf16.mxu0 0
        %1455 = vmatpush1.bf16.msra.mxu0 0
        %1456 = vmatprep.subr.bf16.mxu0 0
        %1457 = vmatpush1.bf16.msra.mxu0 0
        %1458 = vmatprep.subr.bf16.mxu0 0
        %1459 = vmatpush1.bf16.msra.mxu0 0
        %1460 = vmatprep.subr.bf16.mxu0 0
        %1461 = vmatpush1.bf16.msra.mxu0 0
        %1462 = vmatprep.subr.bf16.mxu0 0
        %1463 = vmatpush1.bf16.msra.mxu0 0
        %1464 = vmatprep.subr.bf16.mxu0 0
        %1465 = vmatpush1.bf16.msra.mxu0 0
        %1466 = vmatprep.subr.bf16.mxu0 0
        %1467 = vmatpush1.bf16.msra.mxu0 0
        %1468 = vmatprep.subr.bf16.mxu0 0
        %1469 = vmatpush1.bf16.msra.mxu0 0
        %1470 = vmatprep.subr.bf16.mxu0 0
        %1471 = vmatpush1.bf16.msra.mxu0 0
        %1472 = vmatprep.subr.bf16.mxu0 0
        %1473 = vmatpush1.bf16.msra.mxu0 0
        %1474 = vmatprep.subr.bf16.mxu0 0
        %1475 = vmatpush1.bf16.msra.mxu0 0
        %1476 = vmatprep.mubr.bf16.mxu0 0
        %1477 = vmatmul.mubr.bf16.gmra.mrb[0].mxu0 %v1439
        %v1478 = vpop.f32.mrb[0].mxu0
        %v1479 = vadd.f32 0.0, %v1478
        %v1480 = vpop.f32.mrb[0].mxu0
        %v1481 = vpop.f32.mrb[0].mxu0
        %v1482 = vpop.f32.mrb[0].mxu0
        %1483 = vdwg.mxu0
        %v1484 = vmul.f32 %v1157, %v1099
        %v1485 = vmul.f32 %v1203, %v1100
        %v1486 = vmul.f32 %v1249, %v1101
        %v1487 = vmul.f32 %v1295, %v1102
        %v1488 = vmul.f32 %v1341, %v1103
        %v1489 = vmul.f32 %v1387, %v1104
        %v1490 = vmul.f32 %v1433, %v1105
        %v1491 = vmul.f32 %v1479, %v1106
        %v1492 = vpack.c.bf16 %v1484, %v1484
        %v1493 = vpack.c.bf16 %v1485, %v1485
        %v1494 = vpack.c.bf16 %v1486, %v1486
        %v1495 = vpack.c.bf16 %v1487, %v1487
        %v1496 = vpack.c.bf16 %v1488, %v1488
        %v1497 = vpack.c.bf16 %v1489, %v1489
        %v1498 = vpack.c.bf16 %v1490, %v1490
        %v1499 = vpack.c.bf16 %v1491, %v1491
        %1500 = vst.msk [vmem:[#allocation5] sm:$0xf] %vm515, %v1492
        %v1502 = vunpack.c.l.b16 %v1493
        %v1503 = vpack.c.b16 %v1502, %v1502
        %1504 = vrot.lane.b32.xlu0 %v1503, 4
        %v1505 = vpop.permute.xlu0 %1504
        %vm1507 = vcmask 60448
        %1508 = vst.msk [vmem:[#allocation5] sm:$0xf] %vm1507, %v1505
        %v1510 = vunpack.c.l.b16 %v1494
        %v1511 = vpack.c.b16 %v1510, %v1510
        %1512 = vrot.lane.b32.xlu0 %v1511, 8
        %v1513 = vpop.permute.xlu0 %1512
        %vm1515 = vcmask 93248
        %1516 = vst.msk [vmem:[#allocation5] sm:$0xf] %vm1515, %v1513
        %v1518 = vunpack.c.l.b16 %v1495
        %v1519 = vpack.c.b16 %v1518, %v1518
        %1520 = vrot.lane.b32.xlu0 %v1519, 12
        %v1521 = vpop.permute.xlu0 %1520
        %vm1523 = vcmask 126048
        %1524 = vst.msk [vmem:[#allocation5] sm:$0xf] %vm1523, %v1521
        %v1526 = vunpack.c.l.b16 %v1496
        %v1527 = vpack.c.b16 %v1526, %v1526
        %1528 = vrot.lane.b32.xlu0 %v1527, 16
        %v1529 = vpop.permute.xlu0 %1528
        %vm1531 = vcmask 158848
        %1532 = vst.msk [vmem:[#allocation5] sm:$0xf] %vm1531, %v1529
        %v1534 = vunpack.c.l.b16 %v1497
        %v1535 = vpack.c.b16 %v1534, %v1534
        %1536 = vrot.lane.b32.xlu0 %v1535, 20
        %v1537 = vpop.permute.xlu0 %1536
        %vm1539 = vcmask 191648
        %1540 = vst.msk [vmem:[#allocation5] sm:$0xf] %vm1539, %v1537
        %v1542 = vunpack.c.l.b16 %v1498
        %v1543 = vpack.c.b16 %v1542, %v1542
        %1544 = vrot.lane.b32.xlu0 %v1543, 24
        %v1545 = vpop.permute.xlu0 %1544
        %vm1547 = vcmask 224448
        %1548 = vst.msk [vmem:[#allocation5] sm:$0xf] %vm1547, %v1545
        %v1550 = vunpack.c.l.b16 %v1499
        %v1551 = vpack.c.b16 %v1550, %v1550
        %1552 = vrot.lane.b32.xlu0 %v1551, 28
        %v1553 = vpop.permute.xlu0 %1552
        %vm1555 = vcmask 257248
        %1556 = vst.msk [vmem:[#allocation5] sm:$0xf] %vm1555, %v1553
        %v1557 = vld [vmem:[#allocation5] sm:$0xf]
        %v1558 = vld [vmem:[#allocation14] sm:$0xf]
        %v1559 = vld [vmem:[#allocation14 + $0x4] sm:$0xf]
        %v1560 = vld [vmem:[#allocation14 + $0x8] sm:$0xf]
        %v1561 = vld [vmem:[#allocation14 + $0xc] sm:$0xf]
        %v1562 = vld [vmem:[#allocation15] sm:$0x1]
        %v1564 = vlaneseq
        %v1565 = vshrl.u32 %v1564, 7
        %v1566 = vsub.s32 0, %v1565
        %v1567 = vrot.slane %v1562, %v1566
        %v1573 = vunpack.c.l.b16 %v1558
        %v1574 = vunpack.c.l.b16 %v1559
        %v1575 = vunpack.c.l.b16 %v1560
        %v1576 = vunpack.c.l.b16 %v1561
        %v1577 = vpack.c.b16 %v1574, %v1573
        %v1578 = vpack.c.b16 %v1576, %v1575
        %v1582 = vsel %vm356, %v1557, 0
        %1584 = vmatprep.subr.bf16.mxu0 0
        %1585 = vmatpush1.bf16.msra.mxu0 %v1577
        %1586 = vmatprep.subr.bf16.mxu0 0
        %1587 = vmatpush1.bf16.msra.mxu0 %v1578
        %1588 = vmatprep.subr.bf16.mxu0 0
        %1589 = vmatpush1.bf16.msra.mxu0 0
        %1590 = vmatprep.subr.bf16.mxu0 0
        %1591 = vmatpush1.bf16.msra.mxu0 0
        %1592 = vmatprep.subr.bf16.mxu0 0
        %1593 = vmatpush1.bf16.msra.mxu0 0
        %1594 = vmatprep.subr.bf16.mxu0 0
        %1595 = vmatpush1.bf16.msra.mxu0 0
        %1596 = vmatprep.subr.bf16.mxu0 0
        %1597 = vmatpush1.bf16.msra.mxu0 0
        %1598 = vmatprep.subr.bf16.mxu0 0
        %1599 = vmatpush1.bf16.msra.mxu0 0
        %1600 = vmatprep.subr.bf16.mxu0 0
        %1601 = vmatpush1.bf16.msra.mxu0 0
        %1602 = vmatprep.subr.bf16.mxu0 0
        %1603 = vmatpush1.bf16.msra.mxu0 0
        %1604 = vmatprep.subr.bf16.mxu0 0
        %1605 = vmatpush1.bf16.msra.mxu0 0
        %1606 = vmatprep.subr.bf16.mxu0 0
        %1607 = vmatpush1.bf16.msra.mxu0 0
        %1608 = vmatprep.subr.bf16.mxu0 0
        %1609 = vmatpush1.bf16.msra.mxu0 0
        %1610 = vmatprep.subr.bf16.mxu0 0
        %1611 = vmatpush1.bf16.msra.mxu0 0
        %1612 = vmatprep.subr.bf16.mxu0 0
        %1613 = vmatpush1.bf16.msra.mxu0 0
        %1614 = vmatprep.subr.bf16.mxu0 0
        %1615 = vmatpush1.bf16.msra.mxu0 0
        %1616 = vmatprep.mubr.bf16.mxu0 0
        %1617 = vmatmul.mubr.bf16.gmra.mrb[0].mxu0 %v1582
        %v1618 = vpop.f32.mrb[0].mxu0
        %v1619 = vadd.f32 %v1567, %v1618
        %v1620 = vpop.f32.mrb[0].mxu0
        %v1621 = vpop.f32.mrb[0].mxu0
        %v1622 = vpop.f32.mrb[0].mxu0
        %1623 = vdwg.mxu0
        %1624 = vst.msk [vmem:[%s337] sm:$0xff] %vm356, %v1619
        %s1625 = sand.u32 %s165, 1
        %s1626 = scalar_lea.sflag [#allocation8], %s1625
        %s1627 = sand.u32 %s165, 1
        %s1628 = smul.addr %s1627, 8
        %s1629 = scalar_lea.vmem [#allocation17], %s1628
        // Predicated region
        $region69: #{tpu_custom_call.1} parent=43 // pred_check
          %p1630 = pneg %p175
        $region70: #{tpu_custom_call.1} parent=43 // pred_check_branch
          %1632 = sbr.rel (%p1630) target = $region72
        $region71: #{tpu_custom_call.1} parent=43 // pred_region
          %s1634 = ssub.s32 128, 128
          %1635 = vsyncadd %s1626, %s1634
          %s1636 = smul.addr %s26, 128
          %s1637 = scalar_lea.hbm %s6, %s1636
          %s1639 = sshll.u32 %s1629, 4
          %s1640 = int_to_ptr.vmem [resolvable:$true] %s1639
          %1642 = dma.vmem_to_hbm [thread:$0]  %s1640, 128, %s1637, %s1626
        $region72: #{tpu_custom_call.1} parent=43 // pred_fallthru
          _
      $region44: #{tpu_custom_call.1} parent=5 // pred_fallthru
        _
      %p1643 = scmp.le.s32.totalorder 2, %s21
      // Predicated region
      $region73: #{tpu_custom_call.1} parent=5 // pred_check
        %p1644 = pneg %p1643
      $region74: #{tpu_custom_call.1} parent=5 // pred_check_branch
        %1646 = sbr.rel (%p1644) target = $region76
      $region75: #{tpu_custom_call.1} parent=5 // pred_region
        %s1647 = ssub.s32 %s21, 2
        // Predicated region
        $region77: #{tpu_custom_call.1} parent=75 // pred_check
          %p1648 = pneg %p181
        $region78: #{tpu_custom_call.1} parent=75 // pred_check_branch
          %1650 = sbr.rel (%p1648) target = $region80
        $region79: #{tpu_custom_call.1} parent=75 // pred_region
          %s1651 = sand.u32 %s166, 1
          %s1652 = scalar_lea.sflag [#allocation8], %s1651
          %s1653 = sand.u32 %s166, 1
          %s1654 = smul.addr %s1653, 8
          %s1655 = scalar_lea.vmem [#allocation17], %s1654
          %1656 = dma.done %s1652, 128
        $region80: #{tpu_custom_call.1} parent=75 // pred_fallthru
          _
      $region76: #{tpu_custom_call.1} parent=5 // pred_fallthru
        _
    $region6: #{tpu_custom_call.1} parent=1 // loop_footer
      %s25 = sadd.s32 1, %s21
    $region7: #{tpu_custom_call.1} parent=1 // loop_footer_branch
      %20 = sbr.rel target = $region3
    $region8: #{tpu_custom_call.1} parent=1 // loop_exit
      _
    %1657 = vsyncpa [#allocation7], 1
    %s1658 = scalar_lea.sflag [#allocation7], 1
    %1659 = vsyncpa %s1658, 1
    %1660 = vsyncpa [#allocation10], 1
    %1661 = vsyncpa [#allocation13], 1
    %1662 = vsyncpa [#allocation16], 1
    %1663 = vsyncpa [#allocation8], 1
    %s1664 = scalar_lea.sflag [#allocation8], 1
    %1665 = vsyncpa %s1664, 1

</llo_original>
